<compile_context>
chip_gen: v7x
topology: tpu7x:2x2x1
jax: 0.10.0
libtpu: 0.0.40
codegen_flags: <defaults>
</compile_context>

<pallas_src>
import math

import jax
import jax.numpy as jnp
from jax import lax
from jax.experimental import pallas as pl
from jax.experimental.pallas import tpu as pltpu


def make_mlp_kernel(num_layers, tm, chunk):
    """Fused MLP kernel: all layers + ReLUs over one row tile, chunked rows."""
    assert tm % chunk == 0
    n_chunks = tm // chunk

    def kernel(*refs):
        x_ref = refs[0]          # f32  [tm, dim_in]
        o_ref = refs[-1]         # f32  [tm, dim_out]
        param_refs = refs[1:-1]  # w0, b0, w1, b1, ... (w bf16, b f32)

        # Tiny, fully-resident weights/biases: load once per grid step.
        ws = [param_refs[2 * l][...] for l in range(num_layers)]
        bs = [param_refs[2 * l + 1][...] for l in range(num_layers)]

        def body(c, carry):
            row0 = pl.multiple_of(c * chunk, chunk)
            # In-kernel bf16 cast (VPU op, hidden under MXU slack).
            h = x_ref[pl.ds(row0, chunk), :].astype(jnp.bfloat16)
            for l in range(num_layers):
                acc = jnp.dot(h, ws[l], preferred_element_type=jnp.float32) + bs[l]
                if l != num_layers - 1:
                    h = jnp.maximum(acc, 0.0).astype(jnp.bfloat16)  # ReLU in f32
                else:
                    h = acc
            o_ref[pl.ds(row0, chunk), :] = h.astype(o_ref.dtype)
            return carry

        lax.fori_loop(0, n_chunks, body, 0, unroll=True)

    return kernel


def _pick_row_tile(N, *, tm_max=2048, tm_min=256):
    """Largest power-of-two tile <= tm_max that still gives a grid of >= 2
    steps (keeps both v7x TensorCores busy)."""
    tm = tm_max
    while tm > tm_min and pl.cdiv(N, tm) < 2:
        tm //= 2
    return tm


def mlp_forward(x, weights, biases, *, tm=None, chunk=256):
    """Runs the fused MLP Pallas kernel.

    x:       [N, dim_in]  float32 (cast to bf16 inside the kernel)
    weights: list of [d_in_l, d_out_l] arrays (transpose of torch layout)
    biases:  list of [1, d_out_l] arrays
    Returns: [N, dim_out] float32
    """
    N, dim_in = x.shape
    num_layers = len(weights)
    dim_out = weights[-1].shape[1]

    if tm is None:
        tm = _pick_row_tile(N)
    chunk = min(chunk, tm)

    w_bf = [w.astype(jnp.bfloat16) for w in weights]
    b_f32 = [b.astype(jnp.float32) for b in biases]

    in_specs = [pl.BlockSpec((tm, dim_in), lambda i: (i, 0))]
    args = [x]
    for w, b in zip(w_bf, b_f32):
        # Small weights/biases: fully resident, constant index_map.
        in_specs.append(pl.BlockSpec(w.shape, lambda i: (0, 0)))
        in_specs.append(pl.BlockSpec(b.shape, lambda i: (0, 0)))
        args.append(w)
        args.append(b)

    out_spec = pl.BlockSpec((tm, dim_out), lambda i: (i, 0))

    flops = 2 * N * sum(w.shape[0] * w.shape[1] for w in weights)
    bytes_accessed = (
        x.size * x.dtype.itemsize
        + sum(w.size * 2 for w in w_bf)
        + sum(b.size * 4 for b in b_f32)
        + N * dim_out * 4
    )

    out = pl.pallas_call(
        make_mlp_kernel(num_layers, tm, chunk),
        out_shape=jax.ShapeDtypeStruct((N, dim_out), jnp.float32),
        grid=(pl.cdiv(N, tm),),  # ragged last block masked by Pallas
        in_specs=in_specs,
        out_specs=out_spec,
        compiler_params=pltpu.CompilerParams(
            dimension_semantics=("parallel",)),
        cost_estimate=pl.CostEstimate(
            flops=flops, transcendentals=0, bytes_accessed=bytes_accessed),
    )(*args)
    return out


def init_mlp_params(key, dim_in, dim_out, dim_hidden, num_layers, bias=True):
    """PyTorch nn.Linear-style init (uniform +/- 1/sqrt(fan_in))."""
    weights, biases = [], []
    for l in range(num_layers):
        d_in = dim_in if l == 0 else dim_hidden
        d_out = dim_out if l == num_layers - 1 else dim_hidden
        key, wk, bk = jax.random.split(key, 3)
        bound = 1.0 / math.sqrt(d_in)
        # stored as [in, out] (transpose of torch's [out, in])
        w = jax.random.uniform(wk, (d_in, d_out), jnp.float32, -bound, bound)
        if bias:
            b = jax.random.uniform(bk, (1, d_out), jnp.float32, -bound, bound)
        else:
            b = jnp.zeros((1, d_out), jnp.float32)
        weights.append(w)
        biases.append(b)
    return weights, biases


def mlp_reference_bf16(x, weights, biases):
    """JAX reference matching kernel precision (bf16 operands, f32 accumulate)."""
    h = x.astype(jnp.bfloat16)
    n = len(weights)
    for l, (w, b) in enumerate(zip(weights, biases)):
        acc = jnp.dot(h, w.astype(jnp.bfloat16),
                      preferred_element_type=jnp.float32) + b.astype(jnp.float32)
        if l != n - 1:
            h = jnp.maximum(acc, 0.0).astype(jnp.bfloat16)
        else:
            h = acc
    return h


def mlp_reference_f32(x, weights, biases):
    h = x
    n = len(weights)
    for l, (w, b) in enumerate(zip(weights, biases)):
        h = h @ w + b
        if l != n - 1:
            h = jnp.maximum(h, 0.0)
    return h


if __name__ == "__main__":
    # Shapes consistent with the NeRF sigma MLP usage:
    # MLP(dim_in=32, dim_out=4, dim_hidden=64, num_layers=3)
    dim_in, dim_out, dim_hidden, num_layers = 32, 4, 64, 3

    key = jax.random.PRNGKey(0)
    key, xk = jax.random.split(key)
    weights, biases = init_mlp_params(key, dim_in, dim_out, dim_hidden, num_layers)

    # Case 1: N divisible by the chosen tile (grid of 2 -> v7x friendly).
    N = 1024
    x = jax.random.normal(xk, (N, dim_in), jnp.float32)
    out = jax.block_until_ready(mlp_forward(x, weights, biases))
    assert out.shape == (N, dim_out)

    ref_bf16 = mlp_reference_bf16(x, weights, biases)
    assert jnp.allclose(out, ref_bf16, atol=1e-3, rtol=1e-3), \
        "mismatch vs. matching-precision JAX reference"
    ref_f32 = mlp_reference_f32(x, weights, biases)
    assert jnp.allclose(out, ref_f32, atol=1e-1, rtol=1e-1), \
        "mismatch vs. f32 JAX reference (semantics)"

    # Case 2: ragged row count (last grid block masked by Pallas).
    N2 = 1000
    key, xk2 = jax.random.split(key)
    x2 = jax.random.normal(xk2, (N2, dim_in), jnp.float32)
    out2 = jax.block_until_ready(mlp_forward(x2, weights, biases))
    assert out2.shape == (N2, dim_out)
    ref2 = mlp_reference_bf16(x2, weights, biases)
    assert jnp.allclose(out2, ref2, atol=1e-3, rtol=1e-3), "ragged-N mismatch"

    print("KERNEL_OK")
</pallas_src>

<mosaic_0001>
module attributes {stable_mosaic.version = 11 : i64} {
  func.func @kernel(%arg0: i32, %arg1: memref<512x32xf32, #tpu.memory_space<vmem>>, %arg2: memref<32x64xbf16, #tpu.memory_space<vmem>>, %arg3: memref<1x64xf32, #tpu.memory_space<vmem>>, %arg4: memref<64x64xbf16, #tpu.memory_space<vmem>>, %arg5: memref<1x64xf32, #tpu.memory_space<vmem>>, %arg6: memref<64x4xbf16, #tpu.memory_space<vmem>>, %arg7: memref<1x4xf32, #tpu.memory_space<vmem>>, %arg8: memref<512x4xf32, #tpu.memory_space<vmem>>) attributes {dimension_semantics = [#tpu.dimension_semantics<parallel>], iteration_bounds = array<i64: 2>, scalar_prefetch = 0 : i64, scratch_operands = 0 : i64, tpu.core_type = #tpu.core_type<tc>, window_params = [{transform_indices = @transform_0, window_bounds = array<i64: 512, 32>}, {pipeline_mode = #tpu.pipeline_mode<synchronous>, transform_indices = @transform_1, window_bounds = array<i64: 32, 64>}, {pipeline_mode = #tpu.pipeline_mode<synchronous>, transform_indices = @transform_2, window_bounds = array<i64: 1, 64>}, {pipeline_mode = #tpu.pipeline_mode<synchronous>, transform_indices = @transform_3, window_bounds = array<i64: 64, 64>}, {pipeline_mode = #tpu.pipeline_mode<synchronous>, transform_indices = @transform_4, window_bounds = array<i64: 1, 64>}, {pipeline_mode = #tpu.pipeline_mode<synchronous>, transform_indices = @transform_5, window_bounds = array<i64: 64, 4>}, {pipeline_mode = #tpu.pipeline_mode<synchronous>, transform_indices = @transform_6, window_bounds = array<i64: 1, 4>}, {transform_indices = @transform_7, window_bounds = array<i64: 512, 4>}]} {
    %c0 = arith.constant 0 : index
    %c0_0 = arith.constant 0 : index
    %0 = vector.load %arg2[%c0, %c0_0] : memref<32x64xbf16, #tpu.memory_space<vmem>>, vector<32x64xbf16>
    %c0_1 = arith.constant 0 : index
    %c0_2 = arith.constant 0 : index
    %1 = vector.load %arg4[%c0_1, %c0_2] : memref<64x64xbf16, #tpu.memory_space<vmem>>, vector<64x64xbf16>
    %c0_3 = arith.constant 0 : index
    %c0_4 = arith.constant 0 : index
    %2 = vector.load %arg6[%c0_3, %c0_4] : memref<64x4xbf16, #tpu.memory_space<vmem>>, vector<64x4xbf16>
    %c0_5 = arith.constant 0 : index
    %c0_6 = arith.constant 0 : index
    %3 = vector.load %arg3[%c0_5, %c0_6] : memref<1x64xf32, #tpu.memory_space<vmem>>, vector<1x64xf32>
    %c0_7 = arith.constant 0 : index
    %c0_8 = arith.constant 0 : index
    %4 = vector.load %arg5[%c0_7, %c0_8] : memref<1x64xf32, #tpu.memory_space<vmem>>, vector<1x64xf32>
    %c0_9 = arith.constant 0 : index
    %c0_10 = arith.constant 0 : index
    %5 = vector.load %arg7[%c0_9, %c0_10] : memref<1x4xf32, #tpu.memory_space<vmem>>, vector<1x4xf32>
    %c0_i32 = arith.constant 0 : i32
    %c256_i32 = arith.constant 256 : i32
    %6 = arith.muli %c0_i32, %c256_i32 : i32
    %7 = tpu.assume_multiple %6, 256 : i32
    %8 = arith.index_cast %7 : i32 to index
    %c0_11 = arith.constant 0 : index
    %9 = vector.load %arg1[%8, %c0_11] : memref<512x32xf32, #tpu.memory_space<vmem>>, vector<256x32xf32>
    %10 = arith.truncf %9 : vector<256x32xf32> to vector<256x32xbf16>
    %cst = arith.constant dense<0.000000e+00> : vector<256x64xf32>
    %11 = tpu.matmul %10, %0, %cst {dimension_numbers = #tpu.dot_dimension_numbers<[1], [0], [0], [1], [0, 0, 1, 1], [], []>} : vector<256x32xbf16>, vector<32x64xbf16>, vector<256x64xf32> -> vector<256x64xf32>
    %12 = vector.broadcast %3 : vector<1x64xf32> to vector<256x64xf32>
    %13 = arith.addf %11, %12 : vector<256x64xf32>
    %cst_12 = arith.constant 0.000000e+00 : f32
    %14 = vector.broadcast %cst_12 : f32 to vector<256x64xf32>
    %15 = arith.maximumf %13, %14 : vector<256x64xf32>
    %16 = arith.truncf %15 : vector<256x64xf32> to vector<256x64xbf16>
    %cst_13 = arith.constant dense<0.000000e+00> : vector<256x64xf32>
    %17 = tpu.matmul %16, %1, %cst_13 {dimension_numbers = #tpu.dot_dimension_numbers<[1], [0], [0], [1], [0, 0, 1, 1], [], []>} : vector<256x64xbf16>, vector<64x64xbf16>, vector<256x64xf32> -> vector<256x64xf32>
    %18 = vector.broadcast %4 : vector<1x64xf32> to vector<256x64xf32>
    %19 = arith.addf %17, %18 : vector<256x64xf32>
    %cst_14 = arith.constant 0.000000e+00 : f32
    %20 = vector.broadcast %cst_14 : f32 to vector<256x64xf32>
    %21 = arith.maximumf %19, %20 : vector<256x64xf32>
    %22 = arith.truncf %21 : vector<256x64xf32> to vector<256x64xbf16>
    %cst_15 = arith.constant dense<0.000000e+00> : vector<256x4xf32>
    %23 = tpu.matmul %22, %2, %cst_15 {dimension_numbers = #tpu.dot_dimension_numbers<[1], [0], [0], [1], [0, 0, 1, 1], [], []>} : vector<256x64xbf16>, vector<64x4xbf16>, vector<256x4xf32> -> vector<256x4xf32>
    %24 = vector.broadcast %5 : vector<1x4xf32> to vector<256x4xf32>
    %25 = arith.addf %23, %24 : vector<256x4xf32>
    %26 = arith.index_cast %7 : i32 to index
    %c0_16 = arith.constant 0 : index
    %27 = vector.load %arg8[%26, %c0_16] : memref<512x4xf32, #tpu.memory_space<vmem>>, vector<256x4xf32>
    tpu.vector_store %arg8[%26, %c0_16], %25 {strides = array<i32>} : memref<512x4xf32, #tpu.memory_space<vmem>>, vector<256x4xf32>,
    %c1_i32 = arith.constant 1 : i32
    %c256_i32_17 = arith.constant 256 : i32
    %28 = arith.muli %c1_i32, %c256_i32_17 : i32
    %29 = tpu.assume_multiple %28, 256 : i32
    %30 = arith.index_cast %29 : i32 to index
    %c0_18 = arith.constant 0 : index
    %31 = vector.load %arg1[%30, %c0_18] : memref<512x32xf32, #tpu.memory_space<vmem>>, vector<256x32xf32>
    %32 = arith.truncf %31 : vector<256x32xf32> to vector<256x32xbf16>
    %cst_19 = arith.constant dense<0.000000e+00> : vector<256x64xf32>
    %33 = tpu.matmul %32, %0, %cst_19 {dimension_numbers = #tpu.dot_dimension_numbers<[1], [0], [0], [1], [0, 0, 1, 1], [], []>} : vector<256x32xbf16>, vector<32x64xbf16>, vector<256x64xf32> -> vector<256x64xf32>
    %34 = vector.broadcast %3 : vector<1x64xf32> to vector<256x64xf32>
    %35 = arith.addf %33, %34 : vector<256x64xf32>
    %cst_20 = arith.constant 0.000000e+00 : f32
    %36 = vector.broadcast %cst_20 : f32 to vector<256x64xf32>
    %37 = arith.maximumf %35, %36 : vector<256x64xf32>
    %38 = arith.truncf %37 : vector<256x64xf32> to vector<256x64xbf16>
    %cst_21 = arith.constant dense<0.000000e+00> : vector<256x64xf32>
    %39 = tpu.matmul %38, %1, %cst_21 {dimension_numbers = #tpu.dot_dimension_numbers<[1], [0], [0], [1], [0, 0, 1, 1], [], []>} : vector<256x64xbf16>, vector<64x64xbf16>, vector<256x64xf32> -> vector<256x64xf32>
    %40 = vector.broadcast %4 : vector<1x64xf32> to vector<256x64xf32>
    %41 = arith.addf %39, %40 : vector<256x64xf32>
    %cst_22 = arith.constant 0.000000e+00 : f32
    %42 = vector.broadcast %cst_22 : f32 to vector<256x64xf32>
    %43 = arith.maximumf %41, %42 : vector<256x64xf32>
    %44 = arith.truncf %43 : vector<256x64xf32> to vector<256x64xbf16>
    %cst_23 = arith.constant dense<0.000000e+00> : vector<256x4xf32>
    %45 = tpu.matmul %44, %2, %cst_23 {dimension_numbers = #tpu.dot_dimension_numbers<[1], [0], [0], [1], [0, 0, 1, 1], [], []>} : vector<256x64xbf16>, vector<64x4xbf16>, vector<256x4xf32> -> vector<256x4xf32>
    %46 = vector.broadcast %5 : vector<1x4xf32> to vector<256x4xf32>
    %47 = arith.addf %45, %46 : vector<256x4xf32>
    %48 = arith.index_cast %29 : i32 to index
    %c0_24 = arith.constant 0 : index
    %49 = vector.load %arg8[%48, %c0_24] : memref<512x4xf32, #tpu.memory_space<vmem>>, vector<256x4xf32>
    tpu.vector_store %arg8[%48, %c0_24], %47 {strides = array<i32>} : memref<512x4xf32, #tpu.memory_space<vmem>>, vector<256x4xf32>,
    %c2_i32 = arith.constant 2 : i32
    return
  }
  func.func @transform_0(%arg0: i32) -> (i32, i32) {
    %c0_i32 = arith.constant 0 : i32
    %c0_i32_0 = arith.constant 0 : i32
    return %arg0, %c0_i32 : i32, i32
  }
  func.func @transform_1(%arg0: i32) -> (i32, i32) {
    %c0_i32 = arith.constant 0 : i32
    %c0_i32_0 = arith.constant 0 : i32
    %c0_i32_1 = arith.constant 0 : i32
    return %c0_i32, %c0_i32_0 : i32, i32
  }
  func.func @transform_2(%arg0: i32) -> (i32, i32) {
    %c0_i32 = arith.constant 0 : i32
    %c0_i32_0 = arith.constant 0 : i32
    %c0_i32_1 = arith.constant 0 : i32
    return %c0_i32, %c0_i32_0 : i32, i32
  }
  func.func @transform_3(%arg0: i32) -> (i32, i32) {
    %c0_i32 = arith.constant 0 : i32
    %c0_i32_0 = arith.constant 0 : i32
    %c0_i32_1 = arith.constant 0 : i32
    return %c0_i32, %c0_i32_0 : i32, i32
  }
  func.func @transform_4(%arg0: i32) -> (i32, i32) {
    %c0_i32 = arith.constant 0 : i32
    %c0_i32_0 = arith.constant 0 : i32
    %c0_i32_1 = arith.constant 0 : i32
    return %c0_i32, %c0_i32_0 : i32, i32
  }
  func.func @transform_5(%arg0: i32) -> (i32, i32) {
    %c0_i32 = arith.constant 0 : i32
    %c0_i32_0 = arith.constant 0 : i32
    %c0_i32_1 = arith.constant 0 : i32
    return %c0_i32, %c0_i32_0 : i32, i32
  }
  func.func @transform_6(%arg0: i32) -> (i32, i32) {
    %c0_i32 = arith.constant 0 : i32
    %c0_i32_0 = arith.constant 0 : i32
    %c0_i32_1 = arith.constant 0 : i32
    return %c0_i32, %c0_i32_0 : i32, i32
  }
  func.func @transform_7(%arg0: i32) -> (i32, i32) {
    %c0_i32 = arith.constant 0 : i32
    %c0_i32_0 = arith.constant 0 : i32
    return %arg0, %c0_i32 : i32, i32
  }
}

</mosaic_0001>

<llo_original>
// kernel: tpu_custom_call.1
$region0: #{tpu_custom_call.1}
  #allocation0 [shape = 'u32[]', space=smem, size = 0x4, offset = 0x4, fixed_abs, tag = 'smem constant byte address 0x4 - core index']
  #allocation1 [shape = 'u32[144,128]{1,0:T(1,128)}', space=vmem, size = 0x12000, scoped, tag = 'internal scratch']
  %s0 = inlined_call_operand.vmem [shape: f32[1024,32], index: 0, kind: input, shape index: {}]
  %s1 = inlined_call_operand.vmem [shape: bf16[32,64], index: 1, kind: input, shape index: {}]
  %s2 = inlined_call_operand.vmem [shape: f32[1,64], index: 2, kind: input, shape index: {}]
  %s3 = inlined_call_operand.vmem [shape: bf16[64,64], index: 3, kind: input, shape index: {}]
  %s4 = inlined_call_operand.vmem [shape: f32[1,64], index: 4, kind: input, shape index: {}]
  %s5 = inlined_call_operand.vmem [shape: bf16[64,4], index: 5, kind: input, shape index: {}]
  %s6 = inlined_call_operand.vmem [shape: f32[1,4], index: 6, kind: input, shape index: {}]
  %s7 = inlined_call_operand.vmem [shape: f32[1024,4], index: 7, kind: output, shape index: {}]
  %s8 = sld [smem:[#allocation0]]
  $region61: #{tpu_custom_call.1} parent=0
    _
  %s10 = ssub.s32 1, %s8
  %s11 = scalar_select 0, %s10, %s8
  loop: start=0, step=1, limit=4
  $region2: #{tpu_custom_call.1} parent=0 // loop_pre_header
    _
  $region3: #{tpu_custom_call.1} parent=0 // loop_header
    %s13 = sphi 0, %s17
    %p14 = scmp.ge.s32.totalorder %s13, 4
    %s23 = sphi 0, %s25
    %s26 = sphi 0, %s23
    %s27 = sphi 0, %s26
    %s43 = sphi 0, %s27
    %s47 = sphi 0, %s47
    %s49 = sphi 0, %s47
    %s50 = sphi 0, %s49
    %s64 = sphi 0, %s50
    %s68 = sphi 0, %s68
    %s70 = sphi 0, %s68
    %s71 = sphi 0, %s70
    %s85 = sphi 0, %s71
    %s89 = sphi 0, %s89
    %s91 = sphi 0, %s89
    %s92 = sphi 0, %s91
    %s106 = sphi 0, %s92
    %s110 = sphi 0, %s110
    %s112 = sphi 0, %s110
    %s113 = sphi 0, %s112
    %s127 = sphi 0, %s113
    %s131 = sphi 0, %s131
    %s133 = sphi 0, %s131
    %s134 = sphi 0, %s133
    %s148 = sphi 0, %s134
    %s152 = sphi 0, %s152
    %s154 = sphi 0, %s152
    %s155 = sphi 0, %s154
    %s169 = sphi 0, %s155
    %s175 = sphi 0, %s177
    %s178 = sphi 0, %s175
    %s179 = sphi 0, %s178
    %s195 = sphi 0, %s179
  $region4: #{tpu_custom_call.1} parent=0 // loop_header_branch
    %16 = sbr.rel (%p14) target = $region8
  $region5: #{tpu_custom_call.1} parent=0 // loop_body
    %s18 = ssub.s32 %s13, 1
    %s19 = ssub.s32 %s13, 2
    %s20 = sadd.s32 %s13, 1
    %s21 = ssub.s32 %s13, %s20
    %p22 = scmp.eq.s32.totalorder %s21, 0
    %s24 = sadd.s32 %s23, 1
    %s25 = scalar_select %p22, %s23, %s24
    %p28 = pneg %p22
    %p29 = scmp.eq.s32.totalorder %s13, 1
    %p30 = por %p28, %p29
    %p31 = scmp.ne.s32.totalorder %s23, %s26
    %p32 = scmp.eq.s32.totalorder %s13, 0
    %p33 = por %p31, %p32
    %p34 = scmp.ne.s32.totalorder %s23, %s26
    %p35 = scmp.eq.s32.totalorder %s18, 1
    %p36 = por %p34, %p35
    %p37 = scmp.ne.s32.totalorder %s26, %s27
    %p38 = scmp.eq.s32.totalorder %s18, 0
    %p39 = por %p37, %p38
    %p40 = scmp.ne.s32.totalorder %s26, %s27
    %p41 = scmp.eq.s32.totalorder %s19, 1
    %p42 = por %p40, %p41
    %p44 = scmp.ne.s32.totalorder %s27, %s43
    %p45 = scmp.eq.s32.totalorder %s19, 0
    %p46 = por %p44, %p45
    %s48 = sadd.s32 %s47, 1
    %p51 = scmp.eq.s32.totalorder %s13, 1
    %p52 = scmp.ne.s32.totalorder %s47, %s49
    %p53 = scmp.eq.s32.totalorder %s13, 0
    %p54 = por %p52, %p53
    %p55 = scmp.ne.s32.totalorder %s47, %s49
    %p56 = scmp.eq.s32.totalorder %s18, 1
    %p57 = por %p55, %p56
    %p58 = scmp.ne.s32.totalorder %s49, %s50
    %p59 = scmp.eq.s32.totalorder %s18, 0
    %p60 = por %p58, %p59
    %p61 = scmp.ne.s32.totalorder %s49, %s50
    %p62 = scmp.eq.s32.totalorder %s19, 1
    %p63 = por %p61, %p62
    %p65 = scmp.ne.s32.totalorder %s50, %s64
    %p66 = scmp.eq.s32.totalorder %s19, 0
    %p67 = por %p65, %p66
    %s69 = sadd.s32 %s68, 1
    %p72 = scmp.eq.s32.totalorder %s13, 1
    %p73 = scmp.ne.s32.totalorder %s68, %s70
    %p74 = scmp.eq.s32.totalorder %s13, 0
    %p75 = por %p73, %p74
    %p76 = scmp.ne.s32.totalorder %s68, %s70
    %p77 = scmp.eq.s32.totalorder %s18, 1
    %p78 = por %p76, %p77
    %p79 = scmp.ne.s32.totalorder %s70, %s71
    %p80 = scmp.eq.s32.totalorder %s18, 0
    %p81 = por %p79, %p80
    %p82 = scmp.ne.s32.totalorder %s70, %s71
    %p83 = scmp.eq.s32.totalorder %s19, 1
    %p84 = por %p82, %p83
    %p86 = scmp.ne.s32.totalorder %s71, %s85
    %p87 = scmp.eq.s32.totalorder %s19, 0
    %p88 = por %p86, %p87
    %s90 = sadd.s32 %s89, 1
    %p93 = scmp.eq.s32.totalorder %s13, 1
    %p94 = scmp.ne.s32.totalorder %s89, %s91
    %p95 = scmp.eq.s32.totalorder %s13, 0
    %p96 = por %p94, %p95
    %p97 = scmp.ne.s32.totalorder %s89, %s91
    %p98 = scmp.eq.s32.totalorder %s18, 1
    %p99 = por %p97, %p98
    %p100 = scmp.ne.s32.totalorder %s91, %s92
    %p101 = scmp.eq.s32.totalorder %s18, 0
    %p102 = por %p100, %p101
    %p103 = scmp.ne.s32.totalorder %s91, %s92
    %p104 = scmp.eq.s32.totalorder %s19, 1
    %p105 = por %p103, %p104
    %p107 = scmp.ne.s32.totalorder %s92, %s106
    %p108 = scmp.eq.s32.totalorder %s19, 0
    %p109 = por %p107, %p108
    %s111 = sadd.s32 %s110, 1
    %p114 = scmp.eq.s32.totalorder %s13, 1
    %p115 = scmp.ne.s32.totalorder %s110, %s112
    %p116 = scmp.eq.s32.totalorder %s13, 0
    %p117 = por %p115, %p116
    %p118 = scmp.ne.s32.totalorder %s110, %s112
    %p119 = scmp.eq.s32.totalorder %s18, 1
    %p120 = por %p118, %p119
    %p121 = scmp.ne.s32.totalorder %s112, %s113
    %p122 = scmp.eq.s32.totalorder %s18, 0
    %p123 = por %p121, %p122
    %p124 = scmp.ne.s32.totalorder %s112, %s113
    %p125 = scmp.eq.s32.totalorder %s19, 1
    %p126 = por %p124, %p125
    %p128 = scmp.ne.s32.totalorder %s113, %s127
    %p129 = scmp.eq.s32.totalorder %s19, 0
    %p130 = por %p128, %p129
    %s132 = sadd.s32 %s131, 1
    %p135 = scmp.eq.s32.totalorder %s13, 1
    %p136 = scmp.ne.s32.totalorder %s131, %s133
    %p137 = scmp.eq.s32.totalorder %s13, 0
    %p138 = por %p136, %p137
    %p139 = scmp.ne.s32.totalorder %s131, %s133
    %p140 = scmp.eq.s32.totalorder %s18, 1
    %p141 = por %p139, %p140
    %p142 = scmp.ne.s32.totalorder %s133, %s134
    %p143 = scmp.eq.s32.totalorder %s18, 0
    %p144 = por %p142, %p143
    %p145 = scmp.ne.s32.totalorder %s133, %s134
    %p146 = scmp.eq.s32.totalorder %s19, 1
    %p147 = por %p145, %p146
    %p149 = scmp.ne.s32.totalorder %s134, %s148
    %p150 = scmp.eq.s32.totalorder %s19, 0
    %p151 = por %p149, %p150
    %s153 = sadd.s32 %s152, 1
    %p156 = scmp.eq.s32.totalorder %s13, 1
    %p157 = scmp.ne.s32.totalorder %s152, %s154
    %p158 = scmp.eq.s32.totalorder %s13, 0
    %p159 = por %p157, %p158
    %p160 = scmp.ne.s32.totalorder %s152, %s154
    %p161 = scmp.eq.s32.totalorder %s18, 1
    %p162 = por %p160, %p161
    %p163 = scmp.ne.s32.totalorder %s154, %s155
    %p164 = scmp.eq.s32.totalorder %s18, 0
    %p165 = por %p163, %p164
    %p166 = scmp.ne.s32.totalorder %s154, %s155
    %p167 = scmp.eq.s32.totalorder %s19, 1
    %p168 = por %p166, %p167
    %p170 = scmp.ne.s32.totalorder %s155, %s169
    %p171 = scmp.eq.s32.totalorder %s19, 0
    %p172 = por %p170, %p171
    %s173 = ssub.s32 %s13, %s20
    %p174 = scmp.eq.s32.totalorder %s173, 0
    %s176 = sadd.s32 %s175, 1
    %s177 = scalar_select %p174, %s175, %s176
    %p180 = pneg %p174
    %p181 = scmp.eq.s32.totalorder %s13, 1
    %p182 = por %p180, %p181
    %p183 = scmp.ne.s32.totalorder %s175, %s178
    %p184 = scmp.eq.s32.totalorder %s13, 0
    %p185 = por %p183, %p184
    %p186 = scmp.ne.s32.totalorder %s175, %s178
    %p187 = scmp.eq.s32.totalorder %s18, 1
    %p188 = por %p186, %p187
    %p189 = scmp.ne.s32.totalorder %s178, %s179
    %p190 = scmp.eq.s32.totalorder %s18, 0
    %p191 = por %p189, %p190
    %p192 = scmp.ne.s32.totalorder %s178, %s179
    %p193 = scmp.eq.s32.totalorder %s19, 1
    %p194 = por %p192, %p193
    %p196 = scmp.ne.s32.totalorder %s179, %s195
    %p197 = scmp.eq.s32.totalorder %s19, 0
    %p198 = por %p196, %p197
    %p199 = scmp.le.s32.totalorder 1, %s13
    %p200 = scmp.lt.s32.totalorder %s13, 3
    %p201 = pnand %p199, %p200
    %p202 = pneg %p201
    // Predicated region
    $region9: #{tpu_custom_call.1} parent=5 // pred_check
      _
    $region10: #{tpu_custom_call.1} parent=5 // pred_check_branch
      %204 = sbr.rel (%p201) target = $region12
    $region11: #{tpu_custom_call.1} parent=5 // pred_region
      %s205 = ssub.s32 %s13, 1
      // Predicated region
      $region13: #{tpu_custom_call.1} parent=11 // pred_check
        %p206 = pneg %p60
      $region14: #{tpu_custom_call.1} parent=11 // pred_check_branch
        %208 = sbr.rel (%p206) target = $region16
      $region15: #{tpu_custom_call.1} parent=11 // pred_region
        _
      $region16: #{tpu_custom_call.1} parent=11 // pred_fallthru
        _
      // Predicated region
      $region17: #{tpu_custom_call.1} parent=11 // pred_check
        %p209 = pneg %p81
      $region18: #{tpu_custom_call.1} parent=11 // pred_check_branch
        %211 = sbr.rel (%p209) target = $region20
      $region19: #{tpu_custom_call.1} parent=11 // pred_region
        _
      $region20: #{tpu_custom_call.1} parent=11 // pred_fallthru
        _
      // Predicated region
      $region21: #{tpu_custom_call.1} parent=11 // pred_check
        %p212 = pneg %p102
      $region22: #{tpu_custom_call.1} parent=11 // pred_check_branch
        %214 = sbr.rel (%p212) target = $region24
      $region23: #{tpu_custom_call.1} parent=11 // pred_region
        _
      $region24: #{tpu_custom_call.1} parent=11 // pred_fallthru
        _
      // Predicated region
      $region25: #{tpu_custom_call.1} parent=11 // pred_check
        %p215 = pneg %p123
      $region26: #{tpu_custom_call.1} parent=11 // pred_check_branch
        %217 = sbr.rel (%p215) target = $region28
      $region27: #{tpu_custom_call.1} parent=11 // pred_region
        _
      $region28: #{tpu_custom_call.1} parent=11 // pred_fallthru
        _
      // Predicated region
      $region29: #{tpu_custom_call.1} parent=11 // pred_check
        %p218 = pneg %p144
      $region30: #{tpu_custom_call.1} parent=11 // pred_check_branch
        %220 = sbr.rel (%p218) target = $region32
      $region31: #{tpu_custom_call.1} parent=11 // pred_region
        _
      $region32: #{tpu_custom_call.1} parent=11 // pred_fallthru
        _
      // Predicated region
      $region33: #{tpu_custom_call.1} parent=11 // pred_check
        %p221 = pneg %p165
      $region34: #{tpu_custom_call.1} parent=11 // pred_check_branch
        %223 = sbr.rel (%p221) target = $region36
      $region35: #{tpu_custom_call.1} parent=11 // pred_region
        _
      $region36: #{tpu_custom_call.1} parent=11 // pred_fallthru
        _
    $region12: #{tpu_custom_call.1} parent=5 // pred_fallthru
      _
    %p224 = scmp.lt.s32.totalorder %s13, 2
    // Predicated region
    $region37: #{tpu_custom_call.1} parent=5 // pred_check
      %p225 = pneg %p224
    $region38: #{tpu_custom_call.1} parent=5 // pred_check_branch
      %227 = sbr.rel (%p225) target = $region40
    $region39: #{tpu_custom_call.1} parent=5 // pred_region
      // Predicated region
      $region41: #{tpu_custom_call.1} parent=39 // pred_check
        %p228 = pneg %p33
      $region42: #{tpu_custom_call.1} parent=39 // pred_check_branch
        %230 = sbr.rel (%p228) target = $region44
      $region43: #{tpu_custom_call.1} parent=39 // pred_region
        %s231 = smul.u32 64, %s13
        %p232 = scmp.lt.s32.totalorder %s231, 127
        %s233 = scalar_select %p232, %s231, 127
        %s234 = smul.addr %s233, 8
        %s235 = scalar_lea.vmem %s0, %s234
        %s236 = smul.u32 64, %s13
      $region44: #{tpu_custom_call.1} parent=39 // pred_fallthru
        _
    $region40: #{tpu_custom_call.1} parent=5 // pred_fallthru
      _
    %p237 = scmp.le.s32.totalorder 1, %s13
    %p238 = scmp.lt.s32.totalorder %s13, 3
    %p239 = pnand %p237, %p238
    %p240 = pneg %p239
    // Predicated region
    $region45: #{tpu_custom_call.1} parent=5 // pred_check
      _
    $region46: #{tpu_custom_call.1} parent=5 // pred_check_branch
      %242 = sbr.rel (%p239) target = $region48
    $region47: #{tpu_custom_call.1} parent=5 // pred_region
      %s243 = ssub.s32 %s13, 1
      %s244 = smul.u32 64, %s18
      %p245 = scmp.lt.s32.totalorder %s244, 127
      %s246 = scalar_select %p245, %s244, 127
      %s247 = smul.addr %s246, 8
      %s248 = scalar_lea.vmem %s0, %s247
      %p249 = pneg %p39
      %p250 = pneg %p36
      %p251 = pneg %p60
      %p252 = pneg %p57
      %p253 = pneg %p81
      %p254 = pneg %p78
      %p255 = pneg %p102
      %p256 = pneg %p99
      %p257 = pneg %p123
      %p258 = pneg %p120
      %p259 = pneg %p144
      %p260 = pneg %p141
      %p261 = pneg %p165
      %p262 = pneg %p162
      %p263 = pneg %p191
      %p264 = pneg %p188
      %s265 = smul.u32 64, %s18
      %p266 = scmp.lt.s32.totalorder %s265, 127
      %s267 = scalar_select %p266, %s265, 127
      %s268 = smul.addr %s267, 8
      %s269 = scalar_lea.vmem %s7, %s268
      %s270 = smul.u32 64, %s18
      %p271 = scmp.lt.s32.totalorder %s270, 127
      %s272 = scalar_select %p271, %s270, 127
      %s273 = smul.addr %s272, 8
      %s274 = scalar_lea.vmem %s0, %s273
      %s275 = smul.u32 64, %s18
      %s276 = smul.u32 64, %s18
      %p277 = scmp.lt.s32.totalorder %s276, 127
      %s278 = scalar_select %p277, %s276, 127
      %s279 = smul.addr %s278, 8
      %s280 = scalar_lea.vmem %s7, %s279
      %s281 = smul.u32 64, %s18
      %v283 = vld [vmem:[%s1] sm:$0xf]
      %v284 = vld [vmem:[%s1 + $0x4] sm:$0xf]
      %v285 = vld [vmem:[%s1 + $0x8] sm:$0xf]
      %v286 = vld [vmem:[%s1 + $0xc] sm:$0xf]
      %v287 = vld [vmem:[%s3] sm:$0xf]
      %v288 = vld [vmem:[%s3 + $0x4] sm:$0xf]
      %v289 = vld [vmem:[%s3 + $0x8] sm:$0xf]
      %v290 = vld [vmem:[%s3 + $0xc] sm:$0xf]
      %v291 = vld [vmem:[%s3 + $0x10] sm:$0xf]
      %v292 = vld [vmem:[%s3 + $0x14] sm:$0xf]
      %v293 = vld [vmem:[%s3 + $0x18] sm:$0xf]
      %v294 = vld [vmem:[%s3 + $0x1c] sm:$0xf]
      %v295 = vld [vmem:[%s5] sm:$0xf]
      %v296 = vld [vmem:[%s5 + $0x4] sm:$0xf]
      %v297 = vld [vmem:[%s5 + $0x8] sm:$0xf]
      %v298 = vld [vmem:[%s5 + $0xc] sm:$0xf]
      %v299 = vld [vmem:[%s5 + $0x10] sm:$0xf]
      %v300 = vld [vmem:[%s5 + $0x14] sm:$0xf]
      %v301 = vld [vmem:[%s5 + $0x18] sm:$0xf]
      %v302 = vld [vmem:[%s5 + $0x1c] sm:$0xf]
      %v303 = vld [vmem:[%s2] sm:$0x1]
      %v304 = vld [vmem:[%s4] sm:$0x1]
      %v305 = vld [vmem:[%s6] sm:$0x1]
      %v306 = vld [vmem:[%s274] sm:$0xff]
      %v307 = vld [vmem:[%s274 + $0x8] sm:$0xff]
      %v308 = vld [vmem:[%s274 + $0x10] sm:$0xff]
      %v309 = vld [vmem:[%s274 + $0x18] sm:$0xff]
      %v310 = vld [vmem:[%s274 + $0x20] sm:$0xff]
      %v311 = vld [vmem:[%s274 + $0x28] sm:$0xff]
      %v312 = vld [vmem:[%s274 + $0x30] sm:$0xff]
      %v313 = vld [vmem:[%s274 + $0x38] sm:$0xff]
      %v314 = vld [vmem:[%s274 + $0x40] sm:$0xff]
      %v315 = vld [vmem:[%s274 + $0x48] sm:$0xff]
      %v316 = vld [vmem:[%s274 + $0x50] sm:$0xff]
      %v317 = vld [vmem:[%s274 + $0x58] sm:$0xff]
      %v318 = vld [vmem:[%s274 + $0x60] sm:$0xff]
      %v319 = vld [vmem:[%s274 + $0x68] sm:$0xff]
      %v320 = vld [vmem:[%s274 + $0x70] sm:$0xff]
      %v321 = vld [vmem:[%s274 + $0x78] sm:$0xff]
      %v322 = vld [vmem:[%s274 + $0x80] sm:$0xff]
      %v323 = vld [vmem:[%s274 + $0x88] sm:$0xff]
      %v324 = vld [vmem:[%s274 + $0x90] sm:$0xff]
      %v325 = vld [vmem:[%s274 + $0x98] sm:$0xff]
      %v326 = vld [vmem:[%s274 + $0xa0] sm:$0xff]
      %v327 = vld [vmem:[%s274 + $0xa8] sm:$0xff]
      %v328 = vld [vmem:[%s274 + $0xb0] sm:$0xff]
      %v329 = vld [vmem:[%s274 + $0xb8] sm:$0xff]
      %v330 = vld [vmem:[%s274 + $0xc0] sm:$0xff]
      %v331 = vld [vmem:[%s274 + $0xc8] sm:$0xff]
      %v332 = vld [vmem:[%s274 + $0xd0] sm:$0xff]
      %v333 = vld [vmem:[%s274 + $0xd8] sm:$0xff]
      %v334 = vld [vmem:[%s274 + $0xe0] sm:$0xff]
      %v335 = vld [vmem:[%s274 + $0xe8] sm:$0xff]
      %v336 = vld [vmem:[%s274 + $0xf0] sm:$0xff]
      %v337 = vld [vmem:[%s274 + $0xf8] sm:$0xff]
      %v338 = vpack.c.bf16 %v307, %v306
      %v339 = vpack.c.bf16 %v309, %v308
      %v340 = vpack.c.bf16 %v311, %v310
      %v341 = vpack.c.bf16 %v313, %v312
      %v342 = vpack.c.bf16 %v315, %v314
      %v343 = vpack.c.bf16 %v317, %v316
      %v344 = vpack.c.bf16 %v319, %v318
      %v345 = vpack.c.bf16 %v321, %v320
      %v346 = vpack.c.bf16 %v323, %v322
      %v347 = vpack.c.bf16 %v325, %v324
      %v348 = vpack.c.bf16 %v327, %v326
      %v349 = vpack.c.bf16 %v329, %v328
      %v350 = vpack.c.bf16 %v331, %v330
      %v351 = vpack.c.bf16 %v333, %v332
      %v352 = vpack.c.bf16 %v335, %v334
      %v353 = vpack.c.bf16 %v337, %v336
      %v355 = vlaneseq
      %v356 = vshrl.u32 %v355, 7
      %v357 = vsub.s32 0, %v356
      %v358 = vrot.slane %v303, %v357
      %v364 = vunpack.c.l.b16 %v283
      %v365 = vunpack.c.l.b16 %v284
      %v366 = vunpack.c.l.b16 %v285
      %v367 = vunpack.c.l.b16 %v286
      %v368 = vpack.c.b16 %v365, %v364
      %v369 = vpack.c.b16 %v367, %v366
      %vm372 = vcmask 261120
      %v374 = vsel %vm372, %v338, 0
      %v377 = vsel %vm372, %v339, 0
      %v380 = vsel %vm372, %v340, 0
      %v383 = vsel %vm372, %v341, 0
      %v386 = vsel %vm372, %v342, 0
      %v389 = vsel %vm372, %v343, 0
      %v392 = vsel %vm372, %v344, 0
      %v395 = vsel %vm372, %v345, 0
      %v398 = vsel %vm372, %v346, 0
      %v401 = vsel %vm372, %v347, 0
      %v404 = vsel %vm372, %v348, 0
      %v407 = vsel %vm372, %v349, 0
      %v410 = vsel %vm372, %v350, 0
      %v413 = vsel %vm372, %v351, 0
      %v416 = vsel %vm372, %v352, 0
      %v419 = vsel %vm372, %v353, 0
      %421 = vmatprep.subr.bf16.mxu0 0
      %422 = vmatpush1.bf16.msra.mxu0 %v368
      %423 = vmatprep.subr.bf16.mxu0 0
      %424 = vmatpush1.bf16.msra.mxu0 %v369
      %425 = vmatprep.subr.bf16.mxu0 0
      %426 = vmatpush1.bf16.msra.mxu0 0
      %427 = vmatprep.subr.bf16.mxu0 0
      %428 = vmatpush1.bf16.msra.mxu0 0
      %429 = vmatprep.subr.bf16.mxu0 0
      %430 = vmatpush1.bf16.msra.mxu0 0
      %431 = vmatprep.subr.bf16.mxu0 0
      %432 = vmatpush1.bf16.msra.mxu0 0
      %433 = vmatprep.subr.bf16.mxu0 0
      %434 = vmatpush1.bf16.msra.mxu0 0
      %435 = vmatprep.subr.bf16.mxu0 0
      %436 = vmatpush1.bf16.msra.mxu0 0
      %437 = vmatprep.subr.bf16.mxu0 0
      %438 = vmatpush1.bf16.msra.mxu0 0
      %439 = vmatprep.subr.bf16.mxu0 0
      %440 = vmatpush1.bf16.msra.mxu0 0
      %441 = vmatprep.subr.bf16.mxu0 0
      %442 = vmatpush1.bf16.msra.mxu0 0
      %443 = vmatprep.subr.bf16.mxu0 0
      %444 = vmatpush1.bf16.msra.mxu0 0
      %445 = vmatprep.subr.bf16.mxu0 0
      %446 = vmatpush1.bf16.msra.mxu0 0
      %447 = vmatprep.subr.bf16.mxu0 0
      %448 = vmatpush1.bf16.msra.mxu0 0
      %449 = vmatprep.subr.bf16.mxu0 0
      %450 = vmatpush1.bf16.msra.mxu0 0
      %451 = vmatprep.subr.bf16.mxu0 0
      %452 = vmatpush1.bf16.msra.mxu0 0
      %453 = vmatprep.mubr.bf16.mxu0 0
      %454 = vmatmul.mubr.bf16.gmra.mrb[0].mxu0 %v374
      %v455 = vpop.f32.mrb[0].mxu0
      %v456 = vadd.f32 %v358, %v455
      %v457 = vpop.f32.mrb[0].mxu0
      %v458 = vpop.f32.mrb[0].mxu0
      %v459 = vadd.f32 %v358, %v458
      %v460 = vpop.f32.mrb[0].mxu0
      %461 = vmatprep.mubr.bf16.mxu0 0
      %462 = vmatmul.mubr.bf16.gmra.mrb[0].mxu0 %v377
      %v463 = vpop.f32.mrb[0].mxu0
      %v464 = vadd.f32 %v358, %v463
      %v465 = vpop.f32.mrb[0].mxu0
      %v466 = vpop.f32.mrb[0].mxu0
      %v467 = vadd.f32 %v358, %v466
      %v468 = vpop.f32.mrb[0].mxu0
      %469 = vmatprep.mubr.bf16.mxu0 0
      %470 = vmatmul.mubr.bf16.gmra.mrb[0].mxu0 %v380
      %v471 = vpop.f32.mrb[0].mxu0
      %v472 = vadd.f32 %v358, %v471
      %v473 = vpop.f32.mrb[0].mxu0
      %v474 = vpop.f32.mrb[0].mxu0
      %v475 = vadd.f32 %v358, %v474
      %v476 = vpop.f32.mrb[0].mxu0
      %477 = vmatprep.mubr.bf16.mxu0 0
      %478 = vmatmul.mubr.bf16.gmra.mrb[0].mxu0 %v383
      %v479 = vpop.f32.mrb[0].mxu0
      %v480 = vadd.f32 %v358, %v479
      %v481 = vpop.f32.mrb[0].mxu0
      %v482 = vpop.f32.mrb[0].mxu0
      %v483 = vadd.f32 %v358, %v482
      %v484 = vpop.f32.mrb[0].mxu0
      %485 = vmatprep.mubr.bf16.mxu0 0
      %486 = vmatmul.mubr.bf16.gmra.mrb[0].mxu0 %v386
      %v487 = vpop.f32.mrb[0].mxu0
      %v488 = vadd.f32 %v358, %v487
      %v489 = vpop.f32.mrb[0].mxu0
      %v490 = vpop.f32.mrb[0].mxu0
      %v491 = vadd.f32 %v358, %v490
      %v492 = vpop.f32.mrb[0].mxu0
      %493 = vmatprep.mubr.bf16.mxu0 0
      %494 = vmatmul.mubr.bf16.gmra.mrb[0].mxu0 %v389
      %v495 = vpop.f32.mrb[0].mxu0
      %v496 = vadd.f32 %v358, %v495
      %v497 = vpop.f32.mrb[0].mxu0
      %v498 = vpop.f32.mrb[0].mxu0
      %v499 = vadd.f32 %v358, %v498
      %v500 = vpop.f32.mrb[0].mxu0
      %501 = vmatprep.mubr.bf16.mxu0 0
      %502 = vmatmul.mubr.bf16.gmra.mrb[0].mxu0 %v392
      %v503 = vpop.f32.mrb[0].mxu0
      %v504 = vadd.f32 %v358, %v503
      %v505 = vpop.f32.mrb[0].mxu0
      %v506 = vpop.f32.mrb[0].mxu0
      %v507 = vadd.f32 %v358, %v506
      %v508 = vpop.f32.mrb[0].mxu0
      %509 = vmatprep.mubr.bf16.mxu0 0
      %510 = vmatmul.mubr.bf16.gmra.mrb[0].mxu0 %v395
      %v511 = vpop.f32.mrb[0].mxu0
      %v512 = vadd.f32 %v358, %v511
      %v513 = vpop.f32.mrb[0].mxu0
      %v514 = vpop.f32.mrb[0].mxu0
      %v515 = vadd.f32 %v358, %v514
      %v516 = vpop.f32.mrb[0].mxu0
      %517 = vmatprep.mubr.bf16.mxu0 0
      %518 = vmatmul.mubr.bf16.gmra.mrb[0].mxu0 %v398
      %v519 = vpop.f32.mrb[0].mxu0
      %v520 = vadd.f32 %v358, %v519
      %v521 = vpop.f32.mrb[0].mxu0
      %v522 = vpop.f32.mrb[0].mxu0
      %v523 = vadd.f32 %v358, %v522
      %v524 = vpop.f32.mrb[0].mxu0
      %525 = vmatprep.mubr.bf16.mxu0 0
      %526 = vmatmul.mubr.bf16.gmra.mrb[0].mxu0 %v401
      %v527 = vpop.f32.mrb[0].mxu0
      %v528 = vadd.f32 %v358, %v527
      %v529 = vpop.f32.mrb[0].mxu0
      %v530 = vpop.f32.mrb[0].mxu0
      %v531 = vadd.f32 %v358, %v530
      %v532 = vpop.f32.mrb[0].mxu0
      %533 = vmatprep.mubr.bf16.mxu0 0
      %534 = vmatmul.mubr.bf16.gmra.mrb[0].mxu0 %v404
      %v535 = vpop.f32.mrb[0].mxu0
      %v536 = vadd.f32 %v358, %v535
      %v537 = vpop.f32.mrb[0].mxu0
      %v538 = vpop.f32.mrb[0].mxu0
      %v539 = vadd.f32 %v358, %v538
      %v540 = vpop.f32.mrb[0].mxu0
      %541 = vmatprep.mubr.bf16.mxu0 0
      %542 = vmatmul.mubr.bf16.gmra.mrb[0].mxu0 %v407
      %v543 = vpop.f32.mrb[0].mxu0
      %v544 = vadd.f32 %v358, %v543
      %v545 = vpop.f32.mrb[0].mxu0
      %v546 = vpop.f32.mrb[0].mxu0
      %v547 = vadd.f32 %v358, %v546
      %v548 = vpop.f32.mrb[0].mxu0
      %549 = vmatprep.mubr.bf16.mxu0 0
      %550 = vmatmul.mubr.bf16.gmra.mrb[0].mxu0 %v410
      %v551 = vpop.f32.mrb[0].mxu0
      %v552 = vadd.f32 %v358, %v551
      %v553 = vpop.f32.mrb[0].mxu0
      %v554 = vpop.f32.mrb[0].mxu0
      %v555 = vadd.f32 %v358, %v554
      %v556 = vpop.f32.mrb[0].mxu0
      %557 = vmatprep.mubr.bf16.mxu0 0
      %558 = vmatmul.mubr.bf16.gmra.mrb[0].mxu0 %v413
      %v559 = vpop.f32.mrb[0].mxu0
      %v560 = vadd.f32 %v358, %v559
      %v561 = vpop.f32.mrb[0].mxu0
      %v562 = vpop.f32.mrb[0].mxu0
      %v563 = vadd.f32 %v358, %v562
      %v564 = vpop.f32.mrb[0].mxu0
      %565 = vmatprep.mubr.bf16.mxu0 0
      %566 = vmatmul.mubr.bf16.gmra.mrb[0].mxu0 %v416
      %v567 = vpop.f32.mrb[0].mxu0
      %v568 = vadd.f32 %v358, %v567
      %v569 = vpop.f32.mrb[0].mxu0
      %v570 = vpop.f32.mrb[0].mxu0
      %v571 = vadd.f32 %v358, %v570
      %v572 = vpop.f32.mrb[0].mxu0
      %573 = vmatprep.mubr.bf16.mxu0 0
      %574 = vmatmul.mubr.bf16.gmra.mrb[0].mxu0 %v419
      %v575 = vpop.f32.mrb[0].mxu0
      %v576 = vadd.f32 %v358, %v575
      %v577 = vpop.f32.mrb[0].mxu0
      %v578 = vpop.f32.mrb[0].mxu0
      %v579 = vadd.f32 %v358, %v578
      %v580 = vpop.f32.mrb[0].mxu0
      %581 = vdwg.mxu0
      %v582 = vmax.f32 %v456, 0.0
      %v583 = vmax.f32 %v459, 0.0
      %v584 = vmax.f32 %v464, 0.0
      %v585 = vmax.f32 %v467, 0.0
      %v586 = vmax.f32 %v472, 0.0
      %v587 = vmax.f32 %v475, 0.0
      %v588 = vmax.f32 %v480, 0.0
      %v589 = vmax.f32 %v483, 0.0
      %v590 = vmax.f32 %v488, 0.0
      %v591 = vmax.f32 %v491, 0.0
      %v592 = vmax.f32 %v496, 0.0
      %v593 = vmax.f32 %v499, 0.0
      %v594 = vmax.f32 %v504, 0.0
      %v595 = vmax.f32 %v507, 0.0
      %v596 = vmax.f32 %v512, 0.0
      %v597 = vmax.f32 %v515, 0.0
      %v598 = vmax.f32 %v520, 0.0
      %v599 = vmax.f32 %v523, 0.0
      %v600 = vmax.f32 %v528, 0.0
      %v601 = vmax.f32 %v531, 0.0
      %v602 = vmax.f32 %v536, 0.0
      %v603 = vmax.f32 %v539, 0.0
      %v604 = vmax.f32 %v544, 0.0
      %v605 = vmax.f32 %v547, 0.0
      %v606 = vmax.f32 %v552, 0.0
      %v607 = vmax.f32 %v555, 0.0
      %v608 = vmax.f32 %v560, 0.0
      %v609 = vmax.f32 %v563, 0.0
      %v610 = vmax.f32 %v568, 0.0
      %v611 = vmax.f32 %v571, 0.0
      %v612 = vmax.f32 %v576, 0.0
      %v613 = vmax.f32 %v579, 0.0
      %v614 = vpack.c.bf16 %v583, %v582
      %v615 = vpack.c.bf16 %v585, %v584
      %v616 = vpack.c.bf16 %v587, %v586
      %v617 = vpack.c.bf16 %v589, %v588
      %v618 = vpack.c.bf16 %v591, %v590
      %v619 = vpack.c.bf16 %v593, %v592
      %v620 = vpack.c.bf16 %v595, %v594
      %v621 = vpack.c.bf16 %v597, %v596
      %v622 = vpack.c.bf16 %v599, %v598
      %v623 = vpack.c.bf16 %v601, %v600
      %v624 = vpack.c.bf16 %v603, %v602
      %v625 = vpack.c.bf16 %v605, %v604
      %v626 = vpack.c.bf16 %v607, %v606
      %v627 = vpack.c.bf16 %v609, %v608
      %v628 = vpack.c.bf16 %v611, %v610
      %v629 = vpack.c.bf16 %v613, %v612
      %v631 = vlaneseq
      %v632 = vshrl.u32 %v631, 7
      %v633 = vsub.s32 0, %v632
      %v634 = vrot.slane %v304, %v633
      %v644 = vunpack.c.l.b16 %v287
      %v645 = vunpack.c.l.b16 %v288
      %v646 = vunpack.c.l.b16 %v289
      %v647 = vunpack.c.l.b16 %v290
      %v648 = vunpack.c.l.b16 %v291
      %v649 = vunpack.c.l.b16 %v292
      %v650 = vunpack.c.l.b16 %v293
      %v651 = vunpack.c.l.b16 %v294
      %v652 = vpack.c.b16 %v645, %v644
      %v653 = vpack.c.b16 %v647, %v646
      %v654 = vpack.c.b16 %v649, %v648
      %v655 = vpack.c.b16 %v651, %v650
      %vm660 = vcmask 523264
      %v662 = vsel %vm660, %v614, 0
      %v665 = vsel %vm660, %v615, 0
      %v668 = vsel %vm660, %v616, 0
      %v671 = vsel %vm660, %v617, 0
      %v674 = vsel %vm660, %v618, 0
      %v677 = vsel %vm660, %v619, 0
      %v680 = vsel %vm660, %v620, 0
      %v683 = vsel %vm660, %v621, 0
      %v686 = vsel %vm660, %v622, 0
      %v689 = vsel %vm660, %v623, 0
      %v692 = vsel %vm660, %v624, 0
      %v695 = vsel %vm660, %v625, 0
      %v698 = vsel %vm660, %v626, 0
      %v701 = vsel %vm660, %v627, 0
      %v704 = vsel %vm660, %v628, 0
      %v707 = vsel %vm660, %v629, 0
      %709 = vmatprep.subr.bf16.mxu0 0
      %710 = vmatpush1.bf16.msra.mxu0 %v652
      %711 = vmatprep.subr.bf16.mxu0 0
      %712 = vmatpush1.bf16.msra.mxu0 %v653
      %713 = vmatprep.subr.bf16.mxu0 0
      %714 = vmatpush1.bf16.msra.mxu0 %v654
      %715 = vmatprep.subr.bf16.mxu0 0
      %716 = vmatpush1.bf16.msra.mxu0 %v655
      %717 = vmatprep.subr.bf16.mxu0 0
      %718 = vmatpush1.bf16.msra.mxu0 0
      %719 = vmatprep.subr.bf16.mxu0 0
      %720 = vmatpush1.bf16.msra.mxu0 0
      %721 = vmatprep.subr.bf16.mxu0 0
      %722 = vmatpush1.bf16.msra.mxu0 0
      %723 = vmatprep.subr.bf16.mxu0 0
      %724 = vmatpush1.bf16.msra.mxu0 0
      %725 = vmatprep.subr.bf16.mxu0 0
      %726 = vmatpush1.bf16.msra.mxu0 0
      %727 = vmatprep.subr.bf16.mxu0 0
      %728 = vmatpush1.bf16.msra.mxu0 0
      %729 = vmatprep.subr.bf16.mxu0 0
      %730 = vmatpush1.bf16.msra.mxu0 0
      %731 = vmatprep.subr.bf16.mxu0 0
      %732 = vmatpush1.bf16.msra.mxu0 0
      %733 = vmatprep.subr.bf16.mxu0 0
      %734 = vmatpush1.bf16.msra.mxu0 0
      %735 = vmatprep.subr.bf16.mxu0 0
      %736 = vmatpush1.bf16.msra.mxu0 0
      %737 = vmatprep.subr.bf16.mxu0 0
      %738 = vmatpush1.bf16.msra.mxu0 0
      %739 = vmatprep.subr.bf16.mxu0 0
      %740 = vmatpush1.bf16.msra.mxu0 0
      %741 = vmatprep.mubr.bf16.mxu0 0
      %742 = vmatmul.mubr.bf16.gmra.mrb[0].mxu0 %v662
      %v743 = vpop.f32.mrb[0].mxu0
      %v744 = vadd.f32 %v634, %v743
      %v745 = vpop.f32.mrb[0].mxu0
      %v746 = vpop.f32.mrb[0].mxu0
      %v747 = vadd.f32 %v634, %v746
      %v748 = vpop.f32.mrb[0].mxu0
      %749 = vmatprep.mubr.bf16.mxu0 0
      %750 = vmatmul.mubr.bf16.gmra.mrb[0].mxu0 %v665
      %v751 = vpop.f32.mrb[0].mxu0
      %v752 = vadd.f32 %v634, %v751
      %v753 = vpop.f32.mrb[0].mxu0
      %v754 = vpop.f32.mrb[0].mxu0
      %v755 = vadd.f32 %v634, %v754
      %v756 = vpop.f32.mrb[0].mxu0
      %757 = vmatprep.mubr.bf16.mxu0 0
      %758 = vmatmul.mubr.bf16.gmra.mrb[0].mxu0 %v668
      %v759 = vpop.f32.mrb[0].mxu0
      %v760 = vadd.f32 %v634, %v759
      %v761 = vpop.f32.mrb[0].mxu0
      %v762 = vpop.f32.mrb[0].mxu0
      %v763 = vadd.f32 %v634, %v762
      %v764 = vpop.f32.mrb[0].mxu0
      %765 = vmatprep.mubr.bf16.mxu0 0
      %766 = vmatmul.mubr.bf16.gmra.mrb[0].mxu0 %v671
      %v767 = vpop.f32.mrb[0].mxu0
      %v768 = vadd.f32 %v634, %v767
      %v769 = vpop.f32.mrb[0].mxu0
      %v770 = vpop.f32.mrb[0].mxu0
      %v771 = vadd.f32 %v634, %v770
      %v772 = vpop.f32.mrb[0].mxu0
      %773 = vmatprep.mubr.bf16.mxu0 0
      %774 = vmatmul.mubr.bf16.gmra.mrb[0].mxu0 %v674
      %v775 = vpop.f32.mrb[0].mxu0
      %v776 = vadd.f32 %v634, %v775
      %v777 = vpop.f32.mrb[0].mxu0
      %v778 = vpop.f32.mrb[0].mxu0
      %v779 = vadd.f32 %v634, %v778
      %v780 = vpop.f32.mrb[0].mxu0
      %781 = vmatprep.mubr.bf16.mxu0 0
      %782 = vmatmul.mubr.bf16.gmra.mrb[0].mxu0 %v677
      %v783 = vpop.f32.mrb[0].mxu0
      %v784 = vadd.f32 %v634, %v783
      %v785 = vpop.f32.mrb[0].mxu0
      %v786 = vpop.f32.mrb[0].mxu0
      %v787 = vadd.f32 %v634, %v786
      %v788 = vpop.f32.mrb[0].mxu0
      %789 = vmatprep.mubr.bf16.mxu0 0
      %790 = vmatmul.mubr.bf16.gmra.mrb[0].mxu0 %v680
      %v791 = vpop.f32.mrb[0].mxu0
      %v792 = vadd.f32 %v634, %v791
      %v793 = vpop.f32.mrb[0].mxu0
      %v794 = vpop.f32.mrb[0].mxu0
      %v795 = vadd.f32 %v634, %v794
      %v796 = vpop.f32.mrb[0].mxu0
      %797 = vmatprep.mubr.bf16.mxu0 0
      %798 = vmatmul.mubr.bf16.gmra.mrb[0].mxu0 %v683
      %v799 = vpop.f32.mrb[0].mxu0
      %v800 = vadd.f32 %v634, %v799
      %v801 = vpop.f32.mrb[0].mxu0
      %v802 = vpop.f32.mrb[0].mxu0
      %v803 = vadd.f32 %v634, %v802
      %v804 = vpop.f32.mrb[0].mxu0
      %805 = vmatprep.mubr.bf16.mxu0 0
      %806 = vmatmul.mubr.bf16.gmra.mrb[0].mxu0 %v686
      %v807 = vpop.f32.mrb[0].mxu0
      %v808 = vadd.f32 %v634, %v807
      %v809 = vpop.f32.mrb[0].mxu0
      %v810 = vpop.f32.mrb[0].mxu0
      %v811 = vadd.f32 %v634, %v810
      %v812 = vpop.f32.mrb[0].mxu0
      %813 = vmatprep.mubr.bf16.mxu0 0
      %814 = vmatmul.mubr.bf16.gmra.mrb[0].mxu0 %v689
      %v815 = vpop.f32.mrb[0].mxu0
      %v816 = vadd.f32 %v634, %v815
      %v817 = vpop.f32.mrb[0].mxu0
      %v818 = vpop.f32.mrb[0].mxu0
      %v819 = vadd.f32 %v634, %v818
      %v820 = vpop.f32.mrb[0].mxu0
      %821 = vmatprep.mubr.bf16.mxu0 0
      %822 = vmatmul.mubr.bf16.gmra.mrb[0].mxu0 %v692
      %v823 = vpop.f32.mrb[0].mxu0
      %v824 = vadd.f32 %v634, %v823
      %v825 = vpop.f32.mrb[0].mxu0
      %v826 = vpop.f32.mrb[0].mxu0
      %v827 = vadd.f32 %v634, %v826
      %v828 = vpop.f32.mrb[0].mxu0
      %829 = vmatprep.mubr.bf16.mxu0 0
      %830 = vmatmul.mubr.bf16.gmra.mrb[0].mxu0 %v695
      %v831 = vpop.f32.mrb[0].mxu0
      %v832 = vadd.f32 %v634, %v831
      %v833 = vpop.f32.mrb[0].mxu0
      %v834 = vpop.f32.mrb[0].mxu0
      %v835 = vadd.f32 %v634, %v834
      %v836 = vpop.f32.mrb[0].mxu0
      %837 = vmatprep.mubr.bf16.mxu0 0
      %838 = vmatmul.mubr.bf16.gmra.mrb[0].mxu0 %v698
      %v839 = vpop.f32.mrb[0].mxu0
      %v840 = vadd.f32 %v634, %v839
      %v841 = vpop.f32.mrb[0].mxu0
      %v842 = vpop.f32.mrb[0].mxu0
      %v843 = vadd.f32 %v634, %v842
      %v844 = vpop.f32.mrb[0].mxu0
      %845 = vmatprep.mubr.bf16.mxu0 0
      %846 = vmatmul.mubr.bf16.gmra.mrb[0].mxu0 %v701
      %v847 = vpop.f32.mrb[0].mxu0
      %v848 = vadd.f32 %v634, %v847
      %v849 = vpop.f32.mrb[0].mxu0
      %v850 = vpop.f32.mrb[0].mxu0
      %v851 = vadd.f32 %v634, %v850
      %v852 = vpop.f32.mrb[0].mxu0
      %853 = vmatprep.mubr.bf16.mxu0 0
      %854 = vmatmul.mubr.bf16.gmra.mrb[0].mxu0 %v704
      %v855 = vpop.f32.mrb[0].mxu0
      %v856 = vadd.f32 %v634, %v855
      %v857 = vpop.f32.mrb[0].mxu0
      %v858 = vpop.f32.mrb[0].mxu0
      %v859 = vadd.f32 %v634, %v858
      %v860 = vpop.f32.mrb[0].mxu0
      %861 = vmatprep.mubr.bf16.mxu0 0
      %862 = vmatmul.mubr.bf16.gmra.mrb[0].mxu0 %v707
      %v863 = vpop.f32.mrb[0].mxu0
      %v864 = vadd.f32 %v634, %v863
      %v865 = vpop.f32.mrb[0].mxu0
      %v866 = vpop.f32.mrb[0].mxu0
      %v867 = vadd.f32 %v634, %v866
      %v868 = vpop.f32.mrb[0].mxu0
      %869 = vdwg.mxu0
      %v870 = vmax.f32 %v744, 0.0
      %v871 = vmax.f32 %v747, 0.0
      %v872 = vmax.f32 %v752, 0.0
      %v873 = vmax.f32 %v755, 0.0
      %v874 = vmax.f32 %v760, 0.0
      %v875 = vmax.f32 %v763, 0.0
      %v876 = vmax.f32 %v768, 0.0
      %v877 = vmax.f32 %v771, 0.0
      %v878 = vmax.f32 %v776, 0.0
      %v879 = vmax.f32 %v779, 0.0
      %v880 = vmax.f32 %v784, 0.0
      %v881 = vmax.f32 %v787, 0.0
      %v882 = vmax.f32 %v792, 0.0
      %v883 = vmax.f32 %v795, 0.0
      %v884 = vmax.f32 %v800, 0.0
      %v885 = vmax.f32 %v803, 0.0
      %v886 = vmax.f32 %v808, 0.0
      %v887 = vmax.f32 %v811, 0.0
      %v888 = vmax.f32 %v816, 0.0
      %v889 = vmax.f32 %v819, 0.0
      %v890 = vmax.f32 %v824, 0.0
      %v891 = vmax.f32 %v827, 0.0
      %v892 = vmax.f32 %v832, 0.0
      %v893 = vmax.f32 %v835, 0.0
      %v894 = vmax.f32 %v840, 0.0
      %v895 = vmax.f32 %v843, 0.0
      %v896 = vmax.f32 %v848, 0.0
      %v897 = vmax.f32 %v851, 0.0
      %v898 = vmax.f32 %v856, 0.0
      %v899 = vmax.f32 %v859, 0.0
      %v900 = vmax.f32 %v864, 0.0
      %v901 = vmax.f32 %v867, 0.0
      %v902 = vpack.c.bf16 %v871, %v870
      %v903 = vpack.c.bf16 %v873, %v872
      %v904 = vpack.c.bf16 %v875, %v874
      %v905 = vpack.c.bf16 %v877, %v876
      %v906 = vpack.c.bf16 %v879, %v878
      %v907 = vpack.c.bf16 %v881, %v880
      %v908 = vpack.c.bf16 %v883, %v882
      %v909 = vpack.c.bf16 %v885, %v884
      %v910 = vpack.c.bf16 %v887, %v886
      %v911 = vpack.c.bf16 %v889, %v888
      %v912 = vpack.c.bf16 %v891, %v890
      %v913 = vpack.c.bf16 %v893, %v892
      %v914 = vpack.c.bf16 %v895, %v894
      %v915 = vpack.c.bf16 %v897, %v896
      %v916 = vpack.c.bf16 %v899, %v898
      %v917 = vpack.c.bf16 %v901, %v900
      %v919 = vlaneseq
      %v920 = vshrl.u32 %v919, 7
      %v921 = vsub.s32 0, %v920
      %v922 = vrot.slane %v305, %v921
      %v932 = vunpack.c.l.b16 %v295
      %v933 = vunpack.c.l.b16 %v296
      %v934 = vunpack.c.l.b16 %v297
      %v935 = vunpack.c.l.b16 %v298
      %v936 = vunpack.c.l.b16 %v299
      %v937 = vunpack.c.l.b16 %v300
      %v938 = vunpack.c.l.b16 %v301
      %v939 = vunpack.c.l.b16 %v302
      %v940 = vpack.c.b16 %v933, %v932
      %v941 = vpack.c.b16 %v935, %v934
      %v942 = vpack.c.b16 %v937, %v936
      %v943 = vpack.c.b16 %v939, %v938
      %v949 = vsel %vm660, %v902, 0
      %v952 = vsel %vm660, %v903, 0
      %v955 = vsel %vm660, %v904, 0
      %v958 = vsel %vm660, %v905, 0
      %v961 = vsel %vm660, %v906, 0
      %v964 = vsel %vm660, %v907, 0
      %v967 = vsel %vm660, %v908, 0
      %v970 = vsel %vm660, %v909, 0
      %v973 = vsel %vm660, %v910, 0
      %v976 = vsel %vm660, %v911, 0
      %v979 = vsel %vm660, %v912, 0
      %v982 = vsel %vm660, %v913, 0
      %v985 = vsel %vm660, %v914, 0
      %v988 = vsel %vm660, %v915, 0
      %v991 = vsel %vm660, %v916, 0
      %v994 = vsel %vm660, %v917, 0
      %996 = vmatprep.subr.bf16.mxu0 0
      %997 = vmatpush1.bf16.msra.mxu0 %v940
      %998 = vmatprep.subr.bf16.mxu0 0
      %999 = vmatpush1.bf16.msra.mxu0 %v941
      %1000 = vmatprep.subr.bf16.mxu0 0
      %1001 = vmatpush1.bf16.msra.mxu0 %v942
      %1002 = vmatprep.subr.bf16.mxu0 0
      %1003 = vmatpush1.bf16.msra.mxu0 %v943
      %1004 = vmatprep.subr.bf16.mxu0 0
      %1005 = vmatpush1.bf16.msra.mxu0 0
      %1006 = vmatprep.subr.bf16.mxu0 0
      %1007 = vmatpush1.bf16.msra.mxu0 0
      %1008 = vmatprep.subr.bf16.mxu0 0
      %1009 = vmatpush1.bf16.msra.mxu0 0
      %1010 = vmatprep.subr.bf16.mxu0 0
      %1011 = vmatpush1.bf16.msra.mxu0 0
      %1012 = vmatprep.subr.bf16.mxu0 0
      %1013 = vmatpush1.bf16.msra.mxu0 0
      %1014 = vmatprep.subr.bf16.mxu0 0
      %1015 = vmatpush1.bf16.msra.mxu0 0
      %1016 = vmatprep.subr.bf16.mxu0 0
      %1017 = vmatpush1.bf16.msra.mxu0 0
      %1018 = vmatprep.subr.bf16.mxu0 0
      %1019 = vmatpush1.bf16.msra.mxu0 0
      %1020 = vmatprep.subr.bf16.mxu0 0
      %1021 = vmatpush1.bf16.msra.mxu0 0
      %1022 = vmatprep.subr.bf16.mxu0 0
      %1023 = vmatpush1.bf16.msra.mxu0 0
      %1024 = vmatprep.subr.bf16.mxu0 0
      %1025 = vmatpush1.bf16.msra.mxu0 0
      %1026 = vmatprep.subr.bf16.mxu0 0
      %1027 = vmatpush1.bf16.msra.mxu0 0
      %1028 = vmatprep.mubr.bf16.mxu0 0
      %1029 = vmatmul.mubr.bf16.gmra.mrb[0].mxu0 %v949
      %v1030 = vpop.f32.mrb[0].mxu0
      %v1031 = vadd.f32 %v922, %v1030
      %v1032 = vpop.f32.mrb[0].mxu0
      %v1033 = vpop.f32.mrb[0].mxu0
      %v1034 = vadd.f32 %v922, %v1033
      %v1035 = vpop.f32.mrb[0].mxu0
      %1036 = vmatprep.mubr.bf16.mxu0 0
      %1037 = vmatmul.mubr.bf16.gmra.mrb[0].mxu0 %v952
      %v1038 = vpop.f32.mrb[0].mxu0
      %v1039 = vadd.f32 %v922, %v1038
      %v1040 = vpop.f32.mrb[0].mxu0
      %v1041 = vpop.f32.mrb[0].mxu0
      %v1042 = vadd.f32 %v922, %v1041
      %v1043 = vpop.f32.mrb[0].mxu0
      %1044 = vmatprep.mubr.bf16.mxu0 0
      %1045 = vmatmul.mubr.bf16.gmra.mrb[0].mxu0 %v955
      %v1046 = vpop.f32.mrb[0].mxu0
      %v1047 = vadd.f32 %v922, %v1046
      %v1048 = vpop.f32.mrb[0].mxu0
      %v1049 = vpop.f32.mrb[0].mxu0
      %v1050 = vadd.f32 %v922, %v1049
      %v1051 = vpop.f32.mrb[0].mxu0
      %1052 = vmatprep.mubr.bf16.mxu0 0
      %1053 = vmatmul.mubr.bf16.gmra.mrb[0].mxu0 %v958
      %v1054 = vpop.f32.mrb[0].mxu0
      %v1055 = vadd.f32 %v922, %v1054
      %v1056 = vpop.f32.mrb[0].mxu0
      %v1057 = vpop.f32.mrb[0].mxu0
      %v1058 = vadd.f32 %v922, %v1057
      %v1059 = vpop.f32.mrb[0].mxu0
      %1060 = vmatprep.mubr.bf16.mxu0 0
      %1061 = vmatmul.mubr.bf16.gmra.mrb[0].mxu0 %v961
      %v1062 = vpop.f32.mrb[0].mxu0
      %v1063 = vadd.f32 %v922, %v1062
      %v1064 = vpop.f32.mrb[0].mxu0
      %v1065 = vpop.f32.mrb[0].mxu0
      %v1066 = vadd.f32 %v922, %v1065
      %v1067 = vpop.f32.mrb[0].mxu0
      %1068 = vmatprep.mubr.bf16.mxu0 0
      %1069 = vmatmul.mubr.bf16.gmra.mrb[0].mxu0 %v964
      %v1070 = vpop.f32.mrb[0].mxu0
      %v1071 = vadd.f32 %v922, %v1070
      %v1072 = vpop.f32.mrb[0].mxu0
      %v1073 = vpop.f32.mrb[0].mxu0
      %v1074 = vadd.f32 %v922, %v1073
      %v1075 = vpop.f32.mrb[0].mxu0
      %1076 = vmatprep.mubr.bf16.mxu0 0
      %1077 = vmatmul.mubr.bf16.gmra.mrb[0].mxu0 %v967
      %v1078 = vpop.f32.mrb[0].mxu0
      %v1079 = vadd.f32 %v922, %v1078
      %v1080 = vpop.f32.mrb[0].mxu0
      %v1081 = vpop.f32.mrb[0].mxu0
      %v1082 = vadd.f32 %v922, %v1081
      %v1083 = vpop.f32.mrb[0].mxu0
      %1084 = vmatprep.mubr.bf16.mxu0 0
      %1085 = vmatmul.mubr.bf16.gmra.mrb[0].mxu0 %v970
      %v1086 = vpop.f32.mrb[0].mxu0
      %v1087 = vadd.f32 %v922, %v1086
      %v1088 = vpop.f32.mrb[0].mxu0
      %v1089 = vpop.f32.mrb[0].mxu0
      %v1090 = vadd.f32 %v922, %v1089
      %v1091 = vpop.f32.mrb[0].mxu0
      %1092 = vmatprep.mubr.bf16.mxu0 0
      %1093 = vmatmul.mubr.bf16.gmra.mrb[0].mxu0 %v973
      %v1094 = vpop.f32.mrb[0].mxu0
      %v1095 = vadd.f32 %v922, %v1094
      %v1096 = vpop.f32.mrb[0].mxu0
      %v1097 = vpop.f32.mrb[0].mxu0
      %v1098 = vadd.f32 %v922, %v1097
      %v1099 = vpop.f32.mrb[0].mxu0
      %1100 = vmatprep.mubr.bf16.mxu0 0
      %1101 = vmatmul.mubr.bf16.gmra.mrb[0].mxu0 %v976
      %v1102 = vpop.f32.mrb[0].mxu0
      %v1103 = vadd.f32 %v922, %v1102
      %v1104 = vpop.f32.mrb[0].mxu0
      %v1105 = vpop.f32.mrb[0].mxu0
      %v1106 = vadd.f32 %v922, %v1105
      %v1107 = vpop.f32.mrb[0].mxu0
      %1108 = vmatprep.mubr.bf16.mxu0 0
      %1109 = vmatmul.mubr.bf16.gmra.mrb[0].mxu0 %v979
      %v1110 = vpop.f32.mrb[0].mxu0
      %v1111 = vadd.f32 %v922, %v1110
      %v1112 = vpop.f32.mrb[0].mxu0
      %v1113 = vpop.f32.mrb[0].mxu0
      %v1114 = vadd.f32 %v922, %v1113
      %v1115 = vpop.f32.mrb[0].mxu0
      %1116 = vmatprep.mubr.bf16.mxu0 0
      %1117 = vmatmul.mubr.bf16.gmra.mrb[0].mxu0 %v982
      %v1118 = vpop.f32.mrb[0].mxu0
      %v1119 = vadd.f32 %v922, %v1118
      %v1120 = vpop.f32.mrb[0].mxu0
      %v1121 = vpop.f32.mrb[0].mxu0
      %v1122 = vadd.f32 %v922, %v1121
      %v1123 = vpop.f32.mrb[0].mxu0
      %1124 = vmatprep.mubr.bf16.mxu0 0
      %1125 = vmatmul.mubr.bf16.gmra.mrb[0].mxu0 %v985
      %v1126 = vpop.f32.mrb[0].mxu0
      %v1127 = vadd.f32 %v922, %v1126
      %v1128 = vpop.f32.mrb[0].mxu0
      %v1129 = vpop.f32.mrb[0].mxu0
      %v1130 = vadd.f32 %v922, %v1129
      %v1131 = vpop.f32.mrb[0].mxu0
      %1132 = vmatprep.mubr.bf16.mxu0 0
      %1133 = vmatmul.mubr.bf16.gmra.mrb[0].mxu0 %v988
      %v1134 = vpop.f32.mrb[0].mxu0
      %v1135 = vadd.f32 %v922, %v1134
      %v1136 = vpop.f32.mrb[0].mxu0
      %v1137 = vpop.f32.mrb[0].mxu0
      %v1138 = vadd.f32 %v922, %v1137
      %v1139 = vpop.f32.mrb[0].mxu0
      %1140 = vmatprep.mubr.bf16.mxu0 0
      %1141 = vmatmul.mubr.bf16.gmra.mrb[0].mxu0 %v991
      %v1142 = vpop.f32.mrb[0].mxu0
      %v1143 = vadd.f32 %v922, %v1142
      %v1144 = vpop.f32.mrb[0].mxu0
      %v1145 = vpop.f32.mrb[0].mxu0
      %v1146 = vadd.f32 %v922, %v1145
      %v1147 = vpop.f32.mrb[0].mxu0
      %1148 = vmatprep.mubr.bf16.mxu0 0
      %1149 = vmatmul.mubr.bf16.gmra.mrb[0].mxu0 %v994
      %v1150 = vpop.f32.mrb[0].mxu0
      %v1151 = vadd.f32 %v922, %v1150
      %v1152 = vpop.f32.mrb[0].mxu0
      %v1153 = vpop.f32.mrb[0].mxu0
      %v1154 = vadd.f32 %v922, %v1153
      %v1155 = vpop.f32.mrb[0].mxu0
      %1156 = vdwg.mxu0
      %vm1157 = vcmask 31744
      %1158 = vst.msk [vmem:[%s280] sm:$0xff] %vm1157, %v1031
      %1159 = vst.msk [vmem:[%s280 + $0x8] sm:$0xff] %vm1157, %v1034
      %1160 = vst.msk [vmem:[%s280 + $0x10] sm:$0xff] %vm1157, %v1039
      %1161 = vst.msk [vmem:[%s280 + $0x18] sm:$0xff] %vm1157, %v1042
      %1162 = vst.msk [vmem:[%s280 + $0x20] sm:$0xff] %vm1157, %v1047
      %1163 = vst.msk [vmem:[%s280 + $0x28] sm:$0xff] %vm1157, %v1050
      %1164 = vst.msk [vmem:[%s280 + $0x30] sm:$0xff] %vm1157, %v1055
      %1165 = vst.msk [vmem:[%s280 + $0x38] sm:$0xff] %vm1157, %v1058
      %1166 = vst.msk [vmem:[%s280 + $0x40] sm:$0xff] %vm1157, %v1063
      %1167 = vst.msk [vmem:[%s280 + $0x48] sm:$0xff] %vm1157, %v1066
      %1168 = vst.msk [vmem:[%s280 + $0x50] sm:$0xff] %vm1157, %v1071
      %1169 = vst.msk [vmem:[%s280 + $0x58] sm:$0xff] %vm1157, %v1074
      %1170 = vst.msk [vmem:[%s280 + $0x60] sm:$0xff] %vm1157, %v1079
      %1171 = vst.msk [vmem:[%s280 + $0x68] sm:$0xff] %vm1157, %v1082
      %1172 = vst.msk [vmem:[%s280 + $0x70] sm:$0xff] %vm1157, %v1087
      %1173 = vst.msk [vmem:[%s280 + $0x78] sm:$0xff] %vm1157, %v1090
      %1174 = vst.msk [vmem:[%s280 + $0x80] sm:$0xff] %vm1157, %v1095
      %1175 = vst.msk [vmem:[%s280 + $0x88] sm:$0xff] %vm1157, %v1098
      %1176 = vst.msk [vmem:[%s280 + $0x90] sm:$0xff] %vm1157, %v1103
      %1177 = vst.msk [vmem:[%s280 + $0x98] sm:$0xff] %vm1157, %v1106
      %1178 = vst.msk [vmem:[%s280 + $0xa0] sm:$0xff] %vm1157, %v1111
      %1179 = vst.msk [vmem:[%s280 + $0xa8] sm:$0xff] %vm1157, %v1114
      %1180 = vst.msk [vmem:[%s280 + $0xb0] sm:$0xff] %vm1157, %v1119
      %1181 = vst.msk [vmem:[%s280 + $0xb8] sm:$0xff] %vm1157, %v1122
      %1182 = vst.msk [vmem:[%s280 + $0xc0] sm:$0xff] %vm1157, %v1127
      %1183 = vst.msk [vmem:[%s280 + $0xc8] sm:$0xff] %vm1157, %v1130
      %1184 = vst.msk [vmem:[%s280 + $0xd0] sm:$0xff] %vm1157, %v1135
      %1185 = vst.msk [vmem:[%s280 + $0xd8] sm:$0xff] %vm1157, %v1138
      %1186 = vst.msk [vmem:[%s280 + $0xe0] sm:$0xff] %vm1157, %v1143
      %1187 = vst.msk [vmem:[%s280 + $0xe8] sm:$0xff] %vm1157, %v1146
      %1188 = vst.msk [vmem:[%s280 + $0xf0] sm:$0xff] %vm1157, %v1151
      %1189 = vst.msk [vmem:[%s280 + $0xf8] sm:$0xff] %vm1157, %v1154
      %s1190 = scalar_lea.vmem %s274, 256
      %v1191 = vld [vmem:[%s1190] sm:$0xff]
      %v1192 = vld [vmem:[%s1190 + $0x8] sm:$0xff]
      %v1193 = vld [vmem:[%s1190 + $0x10] sm:$0xff]
      %v1194 = vld [vmem:[%s1190 + $0x18] sm:$0xff]
      %v1195 = vld [vmem:[%s1190 + $0x20] sm:$0xff]
      %v1196 = vld [vmem:[%s1190 + $0x28] sm:$0xff]
      %v1197 = vld [vmem:[%s1190 + $0x30] sm:$0xff]
      %v1198 = vld [vmem:[%s1190 + $0x38] sm:$0xff]
      %v1199 = vld [vmem:[%s1190 + $0x40] sm:$0xff]
      %v1200 = vld [vmem:[%s1190 + $0x48] sm:$0xff]
      %v1201 = vld [vmem:[%s1190 + $0x50] sm:$0xff]
      %v1202 = vld [vmem:[%s1190 + $0x58] sm:$0xff]
      %v1203 = vld [vmem:[%s1190 + $0x60] sm:$0xff]
      %v1204 = vld [vmem:[%s1190 + $0x68] sm:$0xff]
      %v1205 = vld [vmem:[%s1190 + $0x70] sm:$0xff]
      %v1206 = vld [vmem:[%s1190 + $0x78] sm:$0xff]
      %v1207 = vld [vmem:[%s1190 + $0x80] sm:$0xff]
      %v1208 = vld [vmem:[%s1190 + $0x88] sm:$0xff]
      %v1209 = vld [vmem:[%s1190 + $0x90] sm:$0xff]
      %v1210 = vld [vmem:[%s1190 + $0x98] sm:$0xff]
      %v1211 = vld [vmem:[%s1190 + $0xa0] sm:$0xff]
      %v1212 = vld [vmem:[%s1190 + $0xa8] sm:$0xff]
      %v1213 = vld [vmem:[%s1190 + $0xb0] sm:$0xff]
      %v1214 = vld [vmem:[%s1190 + $0xb8] sm:$0xff]
      %v1215 = vld [vmem:[%s1190 + $0xc0] sm:$0xff]
      %v1216 = vld [vmem:[%s1190 + $0xc8] sm:$0xff]
      %v1217 = vld [vmem:[%s1190 + $0xd0] sm:$0xff]
      %v1218 = vld [vmem:[%s1190 + $0xd8] sm:$0xff]
      %v1219 = vld [vmem:[%s1190 + $0xe0] sm:$0xff]
      %v1220 = vld [vmem:[%s1190 + $0xe8] sm:$0xff]
      %v1221 = vld [vmem:[%s1190 + $0xf0] sm:$0xff]
      %v1222 = vld [vmem:[%s1190 + $0xf8] sm:$0xff]
      %v1223 = vpack.c.bf16 %v1192, %v1191
      %v1224 = vpack.c.bf16 %v1194, %v1193
      %v1225 = vpack.c.bf16 %v1196, %v1195
      %v1226 = vpack.c.bf16 %v1198, %v1197
      %v1227 = vpack.c.bf16 %v1200, %v1199
      %v1228 = vpack.c.bf16 %v1202, %v1201
      %v1229 = vpack.c.bf16 %v1204, %v1203
      %v1230 = vpack.c.bf16 %v1206, %v1205
      %v1231 = vpack.c.bf16 %v1208, %v1207
      %v1232 = vpack.c.bf16 %v1210, %v1209
      %v1233 = vpack.c.bf16 %v1212, %v1211
      %v1234 = vpack.c.bf16 %v1214, %v1213
      %v1235 = vpack.c.bf16 %v1216, %v1215
      %v1236 = vpack.c.bf16 %v1218, %v1217
      %v1237 = vpack.c.bf16 %v1220, %v1219
      %v1238 = vpack.c.bf16 %v1222, %v1221
      %v1240 = vsel %vm372, %v1223, 0
      %v1243 = vsel %vm372, %v1224, 0
      %v1246 = vsel %vm372, %v1225, 0
      %v1249 = vsel %vm372, %v1226, 0
      %v1252 = vsel %vm372, %v1227, 0
      %v1255 = vsel %vm372, %v1228, 0
      %v1258 = vsel %vm372, %v1229, 0
      %v1261 = vsel %vm372, %v1230, 0
      %v1264 = vsel %vm372, %v1231, 0
      %v1267 = vsel %vm372, %v1232, 0
      %v1270 = vsel %vm372, %v1233, 0
      %v1273 = vsel %vm372, %v1234, 0
      %v1276 = vsel %vm372, %v1235, 0
      %v1279 = vsel %vm372, %v1236, 0
      %v1282 = vsel %vm372, %v1237, 0
      %v1285 = vsel %vm372, %v1238, 0
      %1287 = vmatprep.subr.bf16.mxu0 0
      %1288 = vmatpush1.bf16.msra.mxu0 %v368
      %1289 = vmatprep.subr.bf16.mxu0 0
      %1290 = vmatpush1.bf16.msra.mxu0 %v369
      %1291 = vmatprep.subr.bf16.mxu0 0
      %1292 = vmatpush1.bf16.msra.mxu0 0
      %1293 = vmatprep.subr.bf16.mxu0 0
      %1294 = vmatpush1.bf16.msra.mxu0 0
      %1295 = vmatprep.subr.bf16.mxu0 0
      %1296 = vmatpush1.bf16.msra.mxu0 0
      %1297 = vmatprep.subr.bf16.mxu0 0
      %1298 = vmatpush1.bf16.msra.mxu0 0
      %1299 = vmatprep.subr.bf16.mxu0 0
      %1300 = vmatpush1.bf16.msra.mxu0 0
      %1301 = vmatprep.subr.bf16.mxu0 0
      %1302 = vmatpush1.bf16.msra.mxu0 0
      %1303 = vmatprep.subr.bf16.mxu0 0
      %1304 = vmatpush1.bf16.msra.mxu0 0
      %1305 = vmatprep.subr.bf16.mxu0 0
      %1306 = vmatpush1.bf16.msra.mxu0 0
      %1307 = vmatprep.subr.bf16.mxu0 0
      %1308 = vmatpush1.bf16.msra.mxu0 0
      %1309 = vmatprep.subr.bf16.mxu0 0
      %1310 = vmatpush1.bf16.msra.mxu0 0
      %1311 = vmatprep.subr.bf16.mxu0 0
      %1312 = vmatpush1.bf16.msra.mxu0 0
      %1313 = vmatprep.subr.bf16.mxu0 0
      %1314 = vmatpush1.bf16.msra.mxu0 0
      %1315 = vmatprep.subr.bf16.mxu0 0
      %1316 = vmatpush1.bf16.msra.mxu0 0
      %1317 = vmatprep.subr.bf16.mxu0 0
      %1318 = vmatpush1.bf16.msra.mxu0 0
      %1319 = vmatprep.mubr.bf16.mxu0 0
      %1320 = vmatmul.mubr.bf16.gmra.mrb[0].mxu0 %v1240
      %v1321 = vpop.f32.mrb[0].mxu0
      %v1322 = vadd.f32 %v358, %v1321
      %v1323 = vpop.f32.mrb[0].mxu0
      %v1324 = vpop.f32.mrb[0].mxu0
      %v1325 = vadd.f32 %v358, %v1324
      %v1326 = vpop.f32.mrb[0].mxu0
      %1327 = vmatprep.mubr.bf16.mxu0 0
      %1328 = vmatmul.mubr.bf16.gmra.mrb[0].mxu0 %v1243
      %v1329 = vpop.f32.mrb[0].mxu0
      %v1330 = vadd.f32 %v358, %v1329
      %v1331 = vpop.f32.mrb[0].mxu0
      %v1332 = vpop.f32.mrb[0].mxu0
      %v1333 = vadd.f32 %v358, %v1332
      %v1334 = vpop.f32.mrb[0].mxu0
      %1335 = vmatprep.mubr.bf16.mxu0 0
      %1336 = vmatmul.mubr.bf16.gmra.mrb[0].mxu0 %v1246
      %v1337 = vpop.f32.mrb[0].mxu0
      %v1338 = vadd.f32 %v358, %v1337
      %v1339 = vpop.f32.mrb[0].mxu0
      %v1340 = vpop.f32.mrb[0].mxu0
      %v1341 = vadd.f32 %v358, %v1340
      %v1342 = vpop.f32.mrb[0].mxu0
      %1343 = vmatprep.mubr.bf16.mxu0 0
      %1344 = vmatmul.mubr.bf16.gmra.mrb[0].mxu0 %v1249
      %v1345 = vpop.f32.mrb[0].mxu0
      %v1346 = vadd.f32 %v358, %v1345
      %v1347 = vpop.f32.mrb[0].mxu0
      %v1348 = vpop.f32.mrb[0].mxu0
      %v1349 = vadd.f32 %v358, %v1348
      %v1350 = vpop.f32.mrb[0].mxu0
      %1351 = vmatprep.mubr.bf16.mxu0 0
      %1352 = vmatmul.mubr.bf16.gmra.mrb[0].mxu0 %v1252
      %v1353 = vpop.f32.mrb[0].mxu0
      %v1354 = vadd.f32 %v358, %v1353
      %v1355 = vpop.f32.mrb[0].mxu0
      %v1356 = vpop.f32.mrb[0].mxu0
      %v1357 = vadd.f32 %v358, %v1356
      %v1358 = vpop.f32.mrb[0].mxu0
      %1359 = vmatprep.mubr.bf16.mxu0 0
      %1360 = vmatmul.mubr.bf16.gmra.mrb[0].mxu0 %v1255
      %v1361 = vpop.f32.mrb[0].mxu0
      %v1362 = vadd.f32 %v358, %v1361
      %v1363 = vpop.f32.mrb[0].mxu0
      %v1364 = vpop.f32.mrb[0].mxu0
      %v1365 = vadd.f32 %v358, %v1364
      %v1366 = vpop.f32.mrb[0].mxu0
      %1367 = vmatprep.mubr.bf16.mxu0 0
      %1368 = vmatmul.mubr.bf16.gmra.mrb[0].mxu0 %v1258
      %v1369 = vpop.f32.mrb[0].mxu0
      %v1370 = vadd.f32 %v358, %v1369
      %v1371 = vpop.f32.mrb[0].mxu0
      %v1372 = vpop.f32.mrb[0].mxu0
      %v1373 = vadd.f32 %v358, %v1372
      %v1374 = vpop.f32.mrb[0].mxu0
      %1375 = vmatprep.mubr.bf16.mxu0 0
      %1376 = vmatmul.mubr.bf16.gmra.mrb[0].mxu0 %v1261
      %v1377 = vpop.f32.mrb[0].mxu0
      %v1378 = vadd.f32 %v358, %v1377
      %v1379 = vpop.f32.mrb[0].mxu0
      %v1380 = vpop.f32.mrb[0].mxu0
      %v1381 = vadd.f32 %v358, %v1380
      %v1382 = vpop.f32.mrb[0].mxu0
      %1383 = vmatprep.mubr.bf16.mxu0 0
      %1384 = vmatmul.mubr.bf16.gmra.mrb[0].mxu0 %v1264
      %v1385 = vpop.f32.mrb[0].mxu0
      %v1386 = vadd.f32 %v358, %v1385
      %v1387 = vpop.f32.mrb[0].mxu0
      %v1388 = vpop.f32.mrb[0].mxu0
      %v1389 = vadd.f32 %v358, %v1388
      %v1390 = vpop.f32.mrb[0].mxu0
      %1391 = vmatprep.mubr.bf16.mxu0 0
      %1392 = vmatmul.mubr.bf16.gmra.mrb[0].mxu0 %v1267
      %v1393 = vpop.f32.mrb[0].mxu0
      %v1394 = vadd.f32 %v358, %v1393
      %v1395 = vpop.f32.mrb[0].mxu0
      %v1396 = vpop.f32.mrb[0].mxu0
      %v1397 = vadd.f32 %v358, %v1396
      %v1398 = vpop.f32.mrb[0].mxu0
      %1399 = vmatprep.mubr.bf16.mxu0 0
      %1400 = vmatmul.mubr.bf16.gmra.mrb[0].mxu0 %v1270
      %v1401 = vpop.f32.mrb[0].mxu0
      %v1402 = vadd.f32 %v358, %v1401
      %v1403 = vpop.f32.mrb[0].mxu0
      %v1404 = vpop.f32.mrb[0].mxu0
      %v1405 = vadd.f32 %v358, %v1404
      %v1406 = vpop.f32.mrb[0].mxu0
      %1407 = vmatprep.mubr.bf16.mxu0 0
      %1408 = vmatmul.mubr.bf16.gmra.mrb[0].mxu0 %v1273
      %v1409 = vpop.f32.mrb[0].mxu0
      %v1410 = vadd.f32 %v358, %v1409
      %v1411 = vpop.f32.mrb[0].mxu0
      %v1412 = vpop.f32.mrb[0].mxu0
      %v1413 = vadd.f32 %v358, %v1412
      %v1414 = vpop.f32.mrb[0].mxu0
      %1415 = vmatprep.mubr.bf16.mxu0 0
      %1416 = vmatmul.mubr.bf16.gmra.mrb[0].mxu0 %v1276
      %v1417 = vpop.f32.mrb[0].mxu0
      %v1418 = vadd.f32 %v358, %v1417
      %v1419 = vpop.f32.mrb[0].mxu0
      %v1420 = vpop.f32.mrb[0].mxu0
      %v1421 = vadd.f32 %v358, %v1420
      %v1422 = vpop.f32.mrb[0].mxu0
      %1423 = vmatprep.mubr.bf16.mxu0 0
      %1424 = vmatmul.mubr.bf16.gmra.mrb[0].mxu0 %v1279
      %v1425 = vpop.f32.mrb[0].mxu0
      %v1426 = vadd.f32 %v358, %v1425
      %v1427 = vpop.f32.mrb[0].mxu0
      %v1428 = vpop.f32.mrb[0].mxu0
      %v1429 = vadd.f32 %v358, %v1428
      %v1430 = vpop.f32.mrb[0].mxu0
      %1431 = vmatprep.mubr.bf16.mxu0 0
      %1432 = vmatmul.mubr.bf16.gmra.mrb[0].mxu0 %v1282
      %v1433 = vpop.f32.mrb[0].mxu0
      %v1434 = vadd.f32 %v358, %v1433
      %v1435 = vpop.f32.mrb[0].mxu0
      %v1436 = vpop.f32.mrb[0].mxu0
      %v1437 = vadd.f32 %v358, %v1436
      %v1438 = vpop.f32.mrb[0].mxu0
      %1439 = vmatprep.mubr.bf16.mxu0 0
      %1440 = vmatmul.mubr.bf16.gmra.mrb[0].mxu0 %v1285
      %v1441 = vpop.f32.mrb[0].mxu0
      %v1442 = vadd.f32 %v358, %v1441
      %v1443 = vpop.f32.mrb[0].mxu0
      %v1444 = vpop.f32.mrb[0].mxu0
      %v1445 = vadd.f32 %v358, %v1444
      %v1446 = vpop.f32.mrb[0].mxu0
      %1447 = vdwg.mxu0
      %v1448 = vmax.f32 %v1322, 0.0
      %v1449 = vmax.f32 %v1325, 0.0
      %v1450 = vmax.f32 %v1330, 0.0
      %v1451 = vmax.f32 %v1333, 0.0
      %v1452 = vmax.f32 %v1338, 0.0
      %v1453 = vmax.f32 %v1341, 0.0
      %v1454 = vmax.f32 %v1346, 0.0
      %v1455 = vmax.f32 %v1349, 0.0
      %v1456 = vmax.f32 %v1354, 0.0
      %v1457 = vmax.f32 %v1357, 0.0
      %v1458 = vmax.f32 %v1362, 0.0
      %v1459 = vmax.f32 %v1365, 0.0
      %v1460 = vmax.f32 %v1370, 0.0
      %v1461 = vmax.f32 %v1373, 0.0
      %v1462 = vmax.f32 %v1378, 0.0
      %v1463 = vmax.f32 %v1381, 0.0
      %v1464 = vmax.f32 %v1386, 0.0
      %v1465 = vmax.f32 %v1389, 0.0
      %v1466 = vmax.f32 %v1394, 0.0
      %v1467 = vmax.f32 %v1397, 0.0
      %v1468 = vmax.f32 %v1402, 0.0
      %v1469 = vmax.f32 %v1405, 0.0
      %v1470 = vmax.f32 %v1410, 0.0
      %v1471 = vmax.f32 %v1413, 0.0
      %v1472 = vmax.f32 %v1418, 0.0
      %v1473 = vmax.f32 %v1421, 0.0
      %v1474 = vmax.f32 %v1426, 0.0
      %v1475 = vmax.f32 %v1429, 0.0
      %v1476 = vmax.f32 %v1434, 0.0
      %v1477 = vmax.f32 %v1437, 0.0
      %v1478 = vmax.f32 %v1442, 0.0
      %v1479 = vmax.f32 %v1445, 0.0
      %v1480 = vpack.c.bf16 %v1449, %v1448
      %v1481 = vpack.c.bf16 %v1451, %v1450
      %v1482 = vpack.c.bf16 %v1453, %v1452
      %v1483 = vpack.c.bf16 %v1455, %v1454
      %v1484 = vpack.c.bf16 %v1457, %v1456
      %v1485 = vpack.c.bf16 %v1459, %v1458
      %v1486 = vpack.c.bf16 %v1461, %v1460
      %v1487 = vpack.c.bf16 %v1463, %v1462
      %v1488 = vpack.c.bf16 %v1465, %v1464
      %v1489 = vpack.c.bf16 %v1467, %v1466
      %v1490 = vpack.c.bf16 %v1469, %v1468
      %v1491 = vpack.c.bf16 %v1471, %v1470
      %v1492 = vpack.c.bf16 %v1473, %v1472
      %v1493 = vpack.c.bf16 %v1475, %v1474
      %v1494 = vpack.c.bf16 %v1477, %v1476
      %v1495 = vpack.c.bf16 %v1479, %v1478
      %v1497 = vsel %vm660, %v1480, 0
      %v1500 = vsel %vm660, %v1481, 0
      %v1503 = vsel %vm660, %v1482, 0
      %v1506 = vsel %vm660, %v1483, 0
      %v1509 = vsel %vm660, %v1484, 0
      %v1512 = vsel %vm660, %v1485, 0
      %v1515 = vsel %vm660, %v1486, 0
      %v1518 = vsel %vm660, %v1487, 0
      %v1521 = vsel %vm660, %v1488, 0
      %v1524 = vsel %vm660, %v1489, 0
      %v1527 = vsel %vm660, %v1490, 0
      %v1530 = vsel %vm660, %v1491, 0
      %v1533 = vsel %vm660, %v1492, 0
      %v1536 = vsel %vm660, %v1493, 0
      %v1539 = vsel %vm660, %v1494, 0
      %v1542 = vsel %vm660, %v1495, 0
      %1544 = vmatprep.subr.bf16.mxu0 0
      %1545 = vmatpush1.bf16.msra.mxu0 %v652
      %1546 = vmatprep.subr.bf16.mxu0 0
      %1547 = vmatpush1.bf16.msra.mxu0 %v653
      %1548 = vmatprep.subr.bf16.mxu0 0
      %1549 = vmatpush1.bf16.msra.mxu0 %v654
      %1550 = vmatprep.subr.bf16.mxu0 0
      %1551 = vmatpush1.bf16.msra.mxu0 %v655
      %1552 = vmatprep.subr.bf16.mxu0 0
      %1553 = vmatpush1.bf16.msra.mxu0 0
      %1554 = vmatprep.subr.bf16.mxu0 0
      %1555 = vmatpush1.bf16.msra.mxu0 0
      %1556 = vmatprep.subr.bf16.mxu0 0
      %1557 = vmatpush1.bf16.msra.mxu0 0
      %1558 = vmatprep.subr.bf16.mxu0 0
      %1559 = vmatpush1.bf16.msra.mxu0 0
      %1560 = vmatprep.subr.bf16.mxu0 0
      %1561 = vmatpush1.bf16.msra.mxu0 0
      %1562 = vmatprep.subr.bf16.mxu0 0
      %1563 = vmatpush1.bf16.msra.mxu0 0
      %1564 = vmatprep.subr.bf16.mxu0 0
      %1565 = vmatpush1.bf16.msra.mxu0 0
      %1566 = vmatprep.subr.bf16.mxu0 0
      %1567 = vmatpush1.bf16.msra.mxu0 0
      %1568 = vmatprep.subr.bf16.mxu0 0
      %1569 = vmatpush1.bf16.msra.mxu0 0
      %1570 = vmatprep.subr.bf16.mxu0 0
      %1571 = vmatpush1.bf16.msra.mxu0 0
      %1572 = vmatprep.subr.bf16.mxu0 0
      %1573 = vmatpush1.bf16.msra.mxu0 0
      %1574 = vmatprep.subr.bf16.mxu0 0
      %1575 = vmatpush1.bf16.msra.mxu0 0
      %1576 = vmatprep.mubr.bf16.mxu0 0
      %1577 = vmatmul.mubr.bf16.gmra.mrb[0].mxu0 %v1497
      %v1578 = vpop.f32.mrb[0].mxu0
      %v1579 = vadd.f32 %v634, %v1578
      %v1580 = vpop.f32.mrb[0].mxu0
      %v1581 = vpop.f32.mrb[0].mxu0
      %v1582 = vadd.f32 %v634, %v1581
      %v1583 = vpop.f32.mrb[0].mxu0
      %1584 = vmatprep.mubr.bf16.mxu0 0
      %1585 = vmatmul.mubr.bf16.gmra.mrb[0].mxu0 %v1500
      %v1586 = vpop.f32.mrb[0].mxu0
      %v1587 = vadd.f32 %v634, %v1586
      %v1588 = vpop.f32.mrb[0].mxu0
      %v1589 = vpop.f32.mrb[0].mxu0
      %v1590 = vadd.f32 %v634, %v1589
      %v1591 = vpop.f32.mrb[0].mxu0
      %1592 = vmatprep.mubr.bf16.mxu0 0
      %1593 = vmatmul.mubr.bf16.gmra.mrb[0].mxu0 %v1503
      %v1594 = vpop.f32.mrb[0].mxu0
      %v1595 = vadd.f32 %v634, %v1594
      %v1596 = vpop.f32.mrb[0].mxu0
      %v1597 = vpop.f32.mrb[0].mxu0
      %v1598 = vadd.f32 %v634, %v1597
      %v1599 = vpop.f32.mrb[0].mxu0
      %1600 = vmatprep.mubr.bf16.mxu0 0
      %1601 = vmatmul.mubr.bf16.gmra.mrb[0].mxu0 %v1506
      %v1602 = vpop.f32.mrb[0].mxu0
      %v1603 = vadd.f32 %v634, %v1602
      %v1604 = vpop.f32.mrb[0].mxu0
      %v1605 = vpop.f32.mrb[0].mxu0
      %v1606 = vadd.f32 %v634, %v1605
      %v1607 = vpop.f32.mrb[0].mxu0
      %1608 = vmatprep.mubr.bf16.mxu0 0
      %1609 = vmatmul.mubr.bf16.gmra.mrb[0].mxu0 %v1509
      %v1610 = vpop.f32.mrb[0].mxu0
      %v1611 = vadd.f32 %v634, %v1610
      %v1612 = vpop.f32.mrb[0].mxu0
      %v1613 = vpop.f32.mrb[0].mxu0
      %v1614 = vadd.f32 %v634, %v1613
      %v1615 = vpop.f32.mrb[0].mxu0
      %1616 = vmatprep.mubr.bf16.mxu0 0
      %1617 = vmatmul.mubr.bf16.gmra.mrb[0].mxu0 %v1512
      %v1618 = vpop.f32.mrb[0].mxu0
      %v1619 = vadd.f32 %v634, %v1618
      %v1620 = vpop.f32.mrb[0].mxu0
      %v1621 = vpop.f32.mrb[0].mxu0
      %v1622 = vadd.f32 %v634, %v1621
      %v1623 = vpop.f32.mrb[0].mxu0
      %1624 = vmatprep.mubr.bf16.mxu0 0
      %1625 = vmatmul.mubr.bf16.gmra.mrb[0].mxu0 %v1515
      %v1626 = vpop.f32.mrb[0].mxu0
      %v1627 = vadd.f32 %v634, %v1626
      %v1628 = vpop.f32.mrb[0].mxu0
      %v1629 = vpop.f32.mrb[0].mxu0
      %v1630 = vadd.f32 %v634, %v1629
      %v1631 = vpop.f32.mrb[0].mxu0
      %1632 = vmatprep.mubr.bf16.mxu0 0
      %1633 = vmatmul.mubr.bf16.gmra.mrb[0].mxu0 %v1518
      %v1634 = vpop.f32.mrb[0].mxu0
      %v1635 = vadd.f32 %v634, %v1634
      %v1636 = vpop.f32.mrb[0].mxu0
      %v1637 = vpop.f32.mrb[0].mxu0
      %v1638 = vadd.f32 %v634, %v1637
      %v1639 = vpop.f32.mrb[0].mxu0
      %1640 = vmatprep.mubr.bf16.mxu0 0
      %1641 = vmatmul.mubr.bf16.gmra.mrb[0].mxu0 %v1521
      %v1642 = vpop.f32.mrb[0].mxu0
      %v1643 = vadd.f32 %v634, %v1642
      %v1644 = vpop.f32.mrb[0].mxu0
      %v1645 = vpop.f32.mrb[0].mxu0
      %v1646 = vadd.f32 %v634, %v1645
      %v1647 = vpop.f32.mrb[0].mxu0
      %1648 = vmatprep.mubr.bf16.mxu0 0
      %1649 = vmatmul.mubr.bf16.gmra.mrb[0].mxu0 %v1524
      %v1650 = vpop.f32.mrb[0].mxu0
      %v1651 = vadd.f32 %v634, %v1650
      %v1652 = vpop.f32.mrb[0].mxu0
      %v1653 = vpop.f32.mrb[0].mxu0
      %v1654 = vadd.f32 %v634, %v1653
      %v1655 = vpop.f32.mrb[0].mxu0
      %1656 = vmatprep.mubr.bf16.mxu0 0
      %1657 = vmatmul.mubr.bf16.gmra.mrb[0].mxu0 %v1527
      %v1658 = vpop.f32.mrb[0].mxu0
      %v1659 = vadd.f32 %v634, %v1658
      %v1660 = vpop.f32.mrb[0].mxu0
      %v1661 = vpop.f32.mrb[0].mxu0
      %v1662 = vadd.f32 %v634, %v1661
      %v1663 = vpop.f32.mrb[0].mxu0
      %1664 = vmatprep.mubr.bf16.mxu0 0
      %1665 = vmatmul.mubr.bf16.gmra.mrb[0].mxu0 %v1530
      %v1666 = vpop.f32.mrb[0].mxu0
      %v1667 = vadd.f32 %v634, %v1666
      %v1668 = vpop.f32.mrb[0].mxu0
      %v1669 = vpop.f32.mrb[0].mxu0
      %v1670 = vadd.f32 %v634, %v1669
      %v1671 = vpop.f32.mrb[0].mxu0
      %1672 = vmatprep.mubr.bf16.mxu0 0
      %1673 = vmatmul.mubr.bf16.gmra.mrb[0].mxu0 %v1533
      %v1674 = vpop.f32.mrb[0].mxu0
      %v1675 = vadd.f32 %v634, %v1674
      %v1676 = vpop.f32.mrb[0].mxu0
      %v1677 = vpop.f32.mrb[0].mxu0
      %v1678 = vadd.f32 %v634, %v1677
      %v1679 = vpop.f32.mrb[0].mxu0
      %1680 = vmatprep.mubr.bf16.mxu0 0
      %1681 = vmatmul.mubr.bf16.gmra.mrb[0].mxu0 %v1536
      %v1682 = vpop.f32.mrb[0].mxu0
      %v1683 = vadd.f32 %v634, %v1682
      %v1684 = vpop.f32.mrb[0].mxu0
      %v1685 = vpop.f32.mrb[0].mxu0
      %v1686 = vadd.f32 %v634, %v1685
      %v1687 = vpop.f32.mrb[0].mxu0
      %1688 = vmatprep.mubr.bf16.mxu0 0
      %1689 = vmatmul.mubr.bf16.gmra.mrb[0].mxu0 %v1539
      %v1690 = vpop.f32.mrb[0].mxu0
      %v1691 = vadd.f32 %v634, %v1690
      %v1692 = vpop.f32.mrb[0].mxu0
      %v1693 = vpop.f32.mrb[0].mxu0
      %v1694 = vadd.f32 %v634, %v1693
      %v1695 = vpop.f32.mrb[0].mxu0
      %1696 = vmatprep.mubr.bf16.mxu0 0
      %1697 = vmatmul.mubr.bf16.gmra.mrb[0].mxu0 %v1542
      %v1698 = vpop.f32.mrb[0].mxu0
      %v1699 = vadd.f32 %v634, %v1698
      %v1700 = vpop.f32.mrb[0].mxu0
      %v1701 = vpop.f32.mrb[0].mxu0
      %v1702 = vadd.f32 %v634, %v1701
      %v1703 = vpop.f32.mrb[0].mxu0
      %1704 = vdwg.mxu0
      %v1705 = vmax.f32 %v1579, 0.0
      %v1706 = vmax.f32 %v1582, 0.0
      %v1707 = vmax.f32 %v1587, 0.0
      %v1708 = vmax.f32 %v1590, 0.0
      %v1709 = vmax.f32 %v1595, 0.0
      %v1710 = vmax.f32 %v1598, 0.0
      %v1711 = vmax.f32 %v1603, 0.0
      %v1712 = vmax.f32 %v1606, 0.0
      %v1713 = vmax.f32 %v1611, 0.0
      %v1714 = vmax.f32 %v1614, 0.0
      %v1715 = vmax.f32 %v1619, 0.0
      %v1716 = vmax.f32 %v1622, 0.0
      %v1717 = vmax.f32 %v1627, 0.0
      %v1718 = vmax.f32 %v1630, 0.0
      %v1719 = vmax.f32 %v1635, 0.0
      %v1720 = vmax.f32 %v1638, 0.0
      %v1721 = vmax.f32 %v1643, 0.0
      %v1722 = vmax.f32 %v1646, 0.0
      %v1723 = vmax.f32 %v1651, 0.0
      %v1724 = vmax.f32 %v1654, 0.0
      %v1725 = vmax.f32 %v1659, 0.0
      %v1726 = vmax.f32 %v1662, 0.0
      %v1727 = vmax.f32 %v1667, 0.0
      %v1728 = vmax.f32 %v1670, 0.0
      %v1729 = vmax.f32 %v1675, 0.0
      %v1730 = vmax.f32 %v1678, 0.0
      %v1731 = vmax.f32 %v1683, 0.0
      %v1732 = vmax.f32 %v1686, 0.0
      %v1733 = vmax.f32 %v1691, 0.0
      %v1734 = vmax.f32 %v1694, 0.0
      %v1735 = vmax.f32 %v1699, 0.0
      %v1736 = vmax.f32 %v1702, 0.0
      %v1737 = vpack.c.bf16 %v1706, %v1705
      %v1738 = vpack.c.bf16 %v1708, %v1707
      %v1739 = vpack.c.bf16 %v1710, %v1709
      %v1740 = vpack.c.bf16 %v1712, %v1711
      %v1741 = vpack.c.bf16 %v1714, %v1713
      %v1742 = vpack.c.bf16 %v1716, %v1715
      %v1743 = vpack.c.bf16 %v1718, %v1717
      %v1744 = vpack.c.bf16 %v1720, %v1719
      %v1745 = vpack.c.bf16 %v1722, %v1721
      %v1746 = vpack.c.bf16 %v1724, %v1723
      %v1747 = vpack.c.bf16 %v1726, %v1725
      %v1748 = vpack.c.bf16 %v1728, %v1727
      %v1749 = vpack.c.bf16 %v1730, %v1729
      %v1750 = vpack.c.bf16 %v1732, %v1731
      %v1751 = vpack.c.bf16 %v1734, %v1733
      %v1752 = vpack.c.bf16 %v1736, %v1735
      %v1754 = vsel %vm660, %v1737, 0
      %v1757 = vsel %vm660, %v1738, 0
      %v1760 = vsel %vm660, %v1739, 0
      %v1763 = vsel %vm660, %v1740, 0
      %v1766 = vsel %vm660, %v1741, 0
      %v1769 = vsel %vm660, %v1742, 0
      %v1772 = vsel %vm660, %v1743, 0
      %v1775 = vsel %vm660, %v1744, 0
      %v1778 = vsel %vm660, %v1745, 0
      %v1781 = vsel %vm660, %v1746, 0
      %v1784 = vsel %vm660, %v1747, 0
      %v1787 = vsel %vm660, %v1748, 0
      %v1790 = vsel %vm660, %v1749, 0
      %v1793 = vsel %vm660, %v1750, 0
      %v1796 = vsel %vm660, %v1751, 0
      %v1799 = vsel %vm660, %v1752, 0
      %1801 = vmatprep.subr.bf16.mxu0 0
      %1802 = vmatpush1.bf16.msra.mxu0 %v940
      %1803 = vmatprep.subr.bf16.mxu0 0
      %1804 = vmatpush1.bf16.msra.mxu0 %v941
      %1805 = vmatprep.subr.bf16.mxu0 0
      %1806 = vmatpush1.bf16.msra.mxu0 %v942
      %1807 = vmatprep.subr.bf16.mxu0 0
      %1808 = vmatpush1.bf16.msra.mxu0 %v943
      %1809 = vmatprep.subr.bf16.mxu0 0
      %1810 = vmatpush1.bf16.msra.mxu0 0
      %1811 = vmatprep.subr.bf16.mxu0 0
      %1812 = vmatpush1.bf16.msra.mxu0 0
      %1813 = vmatprep.subr.bf16.mxu0 0
      %1814 = vmatpush1.bf16.msra.mxu0 0
      %1815 = vmatprep.subr.bf16.mxu0 0
      %1816 = vmatpush1.bf16.msra.mxu0 0
      %1817 = vmatprep.subr.bf16.mxu0 0
      %1818 = vmatpush1.bf16.msra.mxu0 0
      %1819 = vmatprep.subr.bf16.mxu0 0
      %1820 = vmatpush1.bf16.msra.mxu0 0
      %1821 = vmatprep.subr.bf16.mxu0 0
      %1822 = vmatpush1.bf16.msra.mxu0 0
      %1823 = vmatprep.subr.bf16.mxu0 0
      %1824 = vmatpush1.bf16.msra.mxu0 0
      %1825 = vmatprep.subr.bf16.mxu0 0
      %1826 = vmatpush1.bf16.msra.mxu0 0
      %1827 = vmatprep.subr.bf16.mxu0 0
      %1828 = vmatpush1.bf16.msra.mxu0 0
      %1829 = vmatprep.subr.bf16.mxu0 0
      %1830 = vmatpush1.bf16.msra.mxu0 0
      %1831 = vmatprep.subr.bf16.mxu0 0
      %1832 = vmatpush1.bf16.msra.mxu0 0
      %1833 = vmatprep.mubr.bf16.mxu0 0
      %1834 = vmatmul.mubr.bf16.gmra.mrb[0].mxu0 %v1754
      %v1835 = vpop.f32.mrb[0].mxu0
      %v1836 = vadd.f32 %v922, %v1835
      %v1837 = vpop.f32.mrb[0].mxu0
      %v1838 = vpop.f32.mrb[0].mxu0
      %v1839 = vadd.f32 %v922, %v1838
      %v1840 = vpop.f32.mrb[0].mxu0
      %1841 = vmatprep.mubr.bf16.mxu0 0
      %1842 = vmatmul.mubr.bf16.gmra.mrb[0].mxu0 %v1757
      %v1843 = vpop.f32.mrb[0].mxu0
      %v1844 = vadd.f32 %v922, %v1843
      %v1845 = vpop.f32.mrb[0].mxu0
      %v1846 = vpop.f32.mrb[0].mxu0
      %v1847 = vadd.f32 %v922, %v1846
      %v1848 = vpop.f32.mrb[0].mxu0
      %1849 = vmatprep.mubr.bf16.mxu0 0
      %1850 = vmatmul.mubr.bf16.gmra.mrb[0].mxu0 %v1760
      %v1851 = vpop.f32.mrb[0].mxu0
      %v1852 = vadd.f32 %v922, %v1851
      %v1853 = vpop.f32.mrb[0].mxu0
      %v1854 = vpop.f32.mrb[0].mxu0
      %v1855 = vadd.f32 %v922, %v1854
      %v1856 = vpop.f32.mrb[0].mxu0
      %1857 = vmatprep.mubr.bf16.mxu0 0
      %1858 = vmatmul.mubr.bf16.gmra.mrb[0].mxu0 %v1763
      %v1859 = vpop.f32.mrb[0].mxu0
      %v1860 = vadd.f32 %v922, %v1859
      %v1861 = vpop.f32.mrb[0].mxu0
      %v1862 = vpop.f32.mrb[0].mxu0
      %v1863 = vadd.f32 %v922, %v1862
      %v1864 = vpop.f32.mrb[0].mxu0
      %1865 = vmatprep.mubr.bf16.mxu0 0
      %1866 = vmatmul.mubr.bf16.gmra.mrb[0].mxu0 %v1766
      %v1867 = vpop.f32.mrb[0].mxu0
      %v1868 = vadd.f32 %v922, %v1867
      %v1869 = vpop.f32.mrb[0].mxu0
      %v1870 = vpop.f32.mrb[0].mxu0
      %v1871 = vadd.f32 %v922, %v1870
      %v1872 = vpop.f32.mrb[0].mxu0
      %1873 = vmatprep.mubr.bf16.mxu0 0
      %1874 = vmatmul.mubr.bf16.gmra.mrb[0].mxu0 %v1769
      %v1875 = vpop.f32.mrb[0].mxu0
      %v1876 = vadd.f32 %v922, %v1875
      %v1877 = vpop.f32.mrb[0].mxu0
      %v1878 = vpop.f32.mrb[0].mxu0
      %v1879 = vadd.f32 %v922, %v1878
      %v1880 = vpop.f32.mrb[0].mxu0
      %1881 = vmatprep.mubr.bf16.mxu0 0
      %1882 = vmatmul.mubr.bf16.gmra.mrb[0].mxu0 %v1772
      %v1883 = vpop.f32.mrb[0].mxu0
      %v1884 = vadd.f32 %v922, %v1883
      %v1885 = vpop.f32.mrb[0].mxu0
      %v1886 = vpop.f32.mrb[0].mxu0
      %v1887 = vadd.f32 %v922, %v1886
      %v1888 = vpop.f32.mrb[0].mxu0
      %1889 = vmatprep.mubr.bf16.mxu0 0
      %1890 = vmatmul.mubr.bf16.gmra.mrb[0].mxu0 %v1775
      %v1891 = vpop.f32.mrb[0].mxu0
      %v1892 = vadd.f32 %v922, %v1891
      %v1893 = vpop.f32.mrb[0].mxu0
      %v1894 = vpop.f32.mrb[0].mxu0
      %v1895 = vadd.f32 %v922, %v1894
      %v1896 = vpop.f32.mrb[0].mxu0
      %1897 = vmatprep.mubr.bf16.mxu0 0
      %1898 = vmatmul.mubr.bf16.gmra.mrb[0].mxu0 %v1778
      %v1899 = vpop.f32.mrb[0].mxu0
      %v1900 = vadd.f32 %v922, %v1899
      %v1901 = vpop.f32.mrb[0].mxu0
      %v1902 = vpop.f32.mrb[0].mxu0
      %v1903 = vadd.f32 %v922, %v1902
      %v1904 = vpop.f32.mrb[0].mxu0
      %1905 = vmatprep.mubr.bf16.mxu0 0
      %1906 = vmatmul.mubr.bf16.gmra.mrb[0].mxu0 %v1781
      %v1907 = vpop.f32.mrb[0].mxu0
      %v1908 = vadd.f32 %v922, %v1907
      %v1909 = vpop.f32.mrb[0].mxu0
      %v1910 = vpop.f32.mrb[0].mxu0
      %v1911 = vadd.f32 %v922, %v1910
      %v1912 = vpop.f32.mrb[0].mxu0
      %1913 = vmatprep.mubr.bf16.mxu0 0
      %1914 = vmatmul.mubr.bf16.gmra.mrb[0].mxu0 %v1784
      %v1915 = vpop.f32.mrb[0].mxu0
      %v1916 = vadd.f32 %v922, %v1915
      %v1917 = vpop.f32.mrb[0].mxu0
      %v1918 = vpop.f32.mrb[0].mxu0
      %v1919 = vadd.f32 %v922, %v1918
      %v1920 = vpop.f32.mrb[0].mxu0
      %1921 = vmatprep.mubr.bf16.mxu0 0
      %1922 = vmatmul.mubr.bf16.gmra.mrb[0].mxu0 %v1787
      %v1923 = vpop.f32.mrb[0].mxu0
      %v1924 = vadd.f32 %v922, %v1923
      %v1925 = vpop.f32.mrb[0].mxu0
      %v1926 = vpop.f32.mrb[0].mxu0
      %v1927 = vadd.f32 %v922, %v1926
      %v1928 = vpop.f32.mrb[0].mxu0
      %1929 = vmatprep.mubr.bf16.mxu0 0
      %1930 = vmatmul.mubr.bf16.gmra.mrb[0].mxu0 %v1790
      %v1931 = vpop.f32.mrb[0].mxu0
      %v1932 = vadd.f32 %v922, %v1931
      %v1933 = vpop.f32.mrb[0].mxu0
      %v1934 = vpop.f32.mrb[0].mxu0
      %v1935 = vadd.f32 %v922, %v1934
      %v1936 = vpop.f32.mrb[0].mxu0
      %1937 = vmatprep.mubr.bf16.mxu0 0
      %1938 = vmatmul.mubr.bf16.gmra.mrb[0].mxu0 %v1793
      %v1939 = vpop.f32.mrb[0].mxu0
      %v1940 = vadd.f32 %v922, %v1939
      %v1941 = vpop.f32.mrb[0].mxu0
      %v1942 = vpop.f32.mrb[0].mxu0
      %v1943 = vadd.f32 %v922, %v1942
      %v1944 = vpop.f32.mrb[0].mxu0
      %1945 = vmatprep.mubr.bf16.mxu0 0
      %1946 = vmatmul.mubr.bf16.gmra.mrb[0].mxu0 %v1796
      %v1947 = vpop.f32.mrb[0].mxu0
      %v1948 = vadd.f32 %v922, %v1947
      %v1949 = vpop.f32.mrb[0].mxu0
      %v1950 = vpop.f32.mrb[0].mxu0
      %v1951 = vadd.f32 %v922, %v1950
      %v1952 = vpop.f32.mrb[0].mxu0
      %1953 = vmatprep.mubr.bf16.mxu0 0
      %1954 = vmatmul.mubr.bf16.gmra.mrb[0].mxu0 %v1799
      %v1955 = vpop.f32.mrb[0].mxu0
      %v1956 = vadd.f32 %v922, %v1955
      %v1957 = vpop.f32.mrb[0].mxu0
      %v1958 = vpop.f32.mrb[0].mxu0
      %v1959 = vadd.f32 %v922, %v1958
      %v1960 = vpop.f32.mrb[0].mxu0
      %1961 = vdwg.mxu0
      %s1962 = scalar_lea.vmem %s280, 256
      %1963 = vst.msk [vmem:[%s1962] sm:$0xff] %vm1157, %v1836
      %1964 = vst.msk [vmem:[%s1962 + $0x8] sm:$0xff] %vm1157, %v1839
      %1965 = vst.msk [vmem:[%s1962 + $0x10] sm:$0xff] %vm1157, %v1844
      %1966 = vst.msk [vmem:[%s1962 + $0x18] sm:$0xff] %vm1157, %v1847
      %1967 = vst.msk [vmem:[%s1962 + $0x20] sm:$0xff] %vm1157, %v1852
      %1968 = vst.msk [vmem:[%s1962 + $0x28] sm:$0xff] %vm1157, %v1855
      %1969 = vst.msk [vmem:[%s1962 + $0x30] sm:$0xff] %vm1157, %v1860
      %1970 = vst.msk [vmem:[%s1962 + $0x38] sm:$0xff] %vm1157, %v1863
      %1971 = vst.msk [vmem:[%s1962 + $0x40] sm:$0xff] %vm1157, %v1868
      %1972 = vst.msk [vmem:[%s1962 + $0x48] sm:$0xff] %vm1157, %v1871
      %1973 = vst.msk [vmem:[%s1962 + $0x50] sm:$0xff] %vm1157, %v1876
      %1974 = vst.msk [vmem:[%s1962 + $0x58] sm:$0xff] %vm1157, %v1879
      %1975 = vst.msk [vmem:[%s1962 + $0x60] sm:$0xff] %vm1157, %v1884
      %1976 = vst.msk [vmem:[%s1962 + $0x68] sm:$0xff] %vm1157, %v1887
      %1977 = vst.msk [vmem:[%s1962 + $0x70] sm:$0xff] %vm1157, %v1892
      %1978 = vst.msk [vmem:[%s1962 + $0x78] sm:$0xff] %vm1157, %v1895
      %1979 = vst.msk [vmem:[%s1962 + $0x80] sm:$0xff] %vm1157, %v1900
      %1980 = vst.msk [vmem:[%s1962 + $0x88] sm:$0xff] %vm1157, %v1903
      %1981 = vst.msk [vmem:[%s1962 + $0x90] sm:$0xff] %vm1157, %v1908
      %1982 = vst.msk [vmem:[%s1962 + $0x98] sm:$0xff] %vm1157, %v1911
      %1983 = vst.msk [vmem:[%s1962 + $0xa0] sm:$0xff] %vm1157, %v1916
      %1984 = vst.msk [vmem:[%s1962 + $0xa8] sm:$0xff] %vm1157, %v1919
      %1985 = vst.msk [vmem:[%s1962 + $0xb0] sm:$0xff] %vm1157, %v1924
      %1986 = vst.msk [vmem:[%s1962 + $0xb8] sm:$0xff] %vm1157, %v1927
      %1987 = vst.msk [vmem:[%s1962 + $0xc0] sm:$0xff] %vm1157, %v1932
      %1988 = vst.msk [vmem:[%s1962 + $0xc8] sm:$0xff] %vm1157, %v1935
      %1989 = vst.msk [vmem:[%s1962 + $0xd0] sm:$0xff] %vm1157, %v1940
      %1990 = vst.msk [vmem:[%s1962 + $0xd8] sm:$0xff] %vm1157, %v1943
      %1991 = vst.msk [vmem:[%s1962 + $0xe0] sm:$0xff] %vm1157, %v1948
      %1992 = vst.msk [vmem:[%s1962 + $0xe8] sm:$0xff] %vm1157, %v1951
      %1993 = vst.msk [vmem:[%s1962 + $0xf0] sm:$0xff] %vm1157, %v1956
      %1994 = vst.msk [vmem:[%s1962 + $0xf8] sm:$0xff] %vm1157, %v1959
      %s1995 = smul.u32 64, %s18
      %p1996 = scmp.lt.s32.totalorder %s1995, 127
      %s1997 = scalar_select %p1996, %s1995, 127
      %s1998 = smul.addr %s1997, 8
      %s1999 = scalar_lea.vmem %s7, %s1998
      // Predicated region
      $region49: #{tpu_custom_call.1} parent=47 // pred_check
        %p2000 = pneg %p188
      $region50: #{tpu_custom_call.1} parent=47 // pred_check_branch
        %2002 = sbr.rel (%p2000) target = $region52
      $region51: #{tpu_custom_call.1} parent=47 // pred_region
        %s2003 = smul.u32 64, %s18
      $region52: #{tpu_custom_call.1} parent=47 // pred_fallthru
        _
    $region48: #{tpu_custom_call.1} parent=5 // pred_fallthru
      _
    %p2004 = scmp.le.s32.totalorder 2, %s13
    // Predicated region
    $region53: #{tpu_custom_call.1} parent=5 // pred_check
      %p2005 = pneg %p2004
    $region54: #{tpu_custom_call.1} parent=5 // pred_check_branch
      %2007 = sbr.rel (%p2005) target = $region56
    $region55: #{tpu_custom_call.1} parent=5 // pred_region
      %s2008 = ssub.s32 %s13, 2
      // Predicated region
      $region57: #{tpu_custom_call.1} parent=55 // pred_check
        %p2009 = pneg %p194
      $region58: #{tpu_custom_call.1} parent=55 // pred_check_branch
        %2011 = sbr.rel (%p2009) target = $region60
      $region59: #{tpu_custom_call.1} parent=55 // pred_region
        %s2012 = smul.u32 64, %s19
        %p2013 = scmp.lt.s32.totalorder %s2012, 127
        %s2014 = scalar_select %p2013, %s2012, 127
        %s2015 = smul.addr %s2014, 8
        %s2016 = scalar_lea.vmem %s7, %s2015
      $region60: #{tpu_custom_call.1} parent=55 // pred_fallthru
        _
    $region56: #{tpu_custom_call.1} parent=5 // pred_fallthru
      _
  $region6: #{tpu_custom_call.1} parent=0 // loop_footer
    %s17 = sadd.s32 1, %s13
  $region7: #{tpu_custom_call.1} parent=0 // loop_footer_branch
    %12 = sbr.rel target = $region3
  $region8: #{tpu_custom_call.1} parent=0 // loop_exit
    _

</llo_original>
